<compile_context>
chip_gen: v7x
topology: tpu7x:2x2x1
jax: 0.10.0
libtpu: 0.0.40
codegen_flags: <defaults>
</compile_context>

<pallas_src>
import functools
import math

import jax
import jax.numpy as jnp
from jax.experimental import pallas as pl
from jax.experimental.pallas import tpu as pltpu

BN_EPS = 1e-5
RES_IN = 0.2     # weight on the input-fc residual
RES_PREV = 0.5   # weight on the previous layer's output
NEG_PAD = -1e30  # bias on padded out_fc columns (exp -> 0 in log_softmax)
LANE = 128


def _round_up(v, m=LANE):
    return ((v + m - 1) // m) * m


def sage_res_kernel(x_ref, a_ref, w_in_ref, b_in_ref,
                    w_cat_ref, b_fused_ref, w_out_ref, b_out_ref, lw_ref,
                    o_ref,
                    h_ref, resin_ref, acc_ref, cat_ref):
    f32 = jnp.float32
    bf16 = jnp.bfloat16
    i = pl.program_id(0)
    hp = h_ref.shape[1]

    # ---- first grid step: input_fc, hoisted input residual, accumulator init ----
    @pl.when(i == 0)
    def _init():
        h0 = (jnp.dot(x_ref[...], w_in_ref[...], preferred_element_type=f32)
              + b_in_ref[...])
        h_ref[...] = h0
        resin_ref[...] = RES_IN * h0
        acc_ref[...] = jnp.zeros_like(acc_ref)

    # ---- SAGEConv + folded (eval) BatchNorm for layer i ----
    h = h_ref[...]                      # (N, Hp) f32: output of layer i-1 (or input_fc)
    h_b = h.astype(bf16)
    agg = jnp.dot(a_ref[...], h_b, preferred_element_type=f32)      # (N, Hp) mean aggr

    # fused lin_l / lin_r: write both halves of a persistent (N, 2*Hp) bf16 scratch,
    # then a single K=2*Hp matmul -- no jnp.concatenate relayout on the critical chain.
    cat_ref[:, 0:hp] = agg.astype(bf16)
    cat_ref[:, hp:2 * hp] = h_b
    t = (jnp.dot(cat_ref[...], w_cat_ref[0], preferred_element_type=f32)
         + b_fused_ref[0])              # SAGE bias + BatchNorm folded into b_fused
    t = jnp.maximum(t, 0.0)             # ReLU; dropout is identity in eval mode

    # residuals: +0.2*input_fc(x) always; +0.5*previous layer output for i > 0
    prev_w = jnp.where(i > 0, RES_PREV, 0.0).astype(f32)
    h_new = t + resin_ref[...] + prev_w * h

    h_ref[...] = h_new
    acc_ref[...] = acc_ref[...] + lw_ref[i] * h_new   # softmax(weights)[i] from SMEM

    # ---- last grid step: out_fc + log_softmax over classes ----
    @pl.when(i == pl.num_programs(0) - 1)
    def _finish():
        logits = (jnp.dot(acc_ref[...].astype(bf16), w_out_ref[...],
                          preferred_element_type=f32) + b_out_ref[...])
        m = jnp.max(logits, axis=-1, keepdims=True)
        s = logits - m
        lse = jnp.log(jnp.sum(jnp.exp(s), axis=-1, keepdims=True))
        o_ref[...] = (s - lse).astype(o_ref.dtype)


def prepare_params(p, f_in):
    """Host-side folding + lane padding:
       * eval-mode BN (+ SAGE bias) folded into the layer weights (exact affine fold);
       * lin_l / lin_r stacked along K into one (2*Hp, Hp) matrix per layer;
       * F_in / H / C zero-padded to multiples of 128 lanes (out_fc pad columns get a
         very negative bias so softmax normalization over real classes is unchanged);
       * matmul operands cast to bf16."""
    bf16 = jnp.bfloat16
    L, H = p["bl"].shape
    C = p["w_out"].shape[1]
    fp, hp, cp = _round_up(f_in), _round_up(H), _round_up(C)

    scale = p["gamma"] * jax.lax.rsqrt(p["rvar"] + BN_EPS)           # (L, H)
    wl_f = p["wl"] * scale[:, None, :]                               # scale output cols
    wr_f = p["wr"] * scale[:, None, :]
    b_f = (p["bl"] - p["rmean"]) * scale + p["beta"]                 # (L, H)

    wl_p = jnp.pad(wl_f, ((0, 0), (0, hp - H), (0, hp - H)))
    wr_p = jnp.pad(wr_f, ((0, 0), (0, hp - H), (0, hp - H)))
    w_cat = jnp.concatenate([wl_p, wr_p], axis=1).astype(bf16)       # (L, 2*Hp, Hp)
    b_fused = jnp.pad(b_f, ((0, 0), (0, hp - H)))[:, None, :]        # (L, 1, Hp)

    w_in = jnp.pad(p["w_in"], ((0, fp - f_in), (0, hp - H))).astype(bf16)
    b_in = jnp.pad(p["b_in"], ((0, 0), (0, hp - H)))

    w_out = jnp.pad(p["w_out"], ((0, hp - H), (0, cp - C))).astype(bf16)
    b_out = jnp.pad(p["b_out"], ((0, 0), (0, cp - C)), constant_values=NEG_PAD)

    pp = {"w_in": w_in, "b_in": b_in, "w_cat": w_cat, "b_fused": b_fused,
          "w_out": w_out, "b_out": b_out, "lw": p["lw"]}
    return pp, (fp, hp, cp, C, L)


def sage_res_forward(x, adj, params):
    n, f_in = x.shape
    pp, (fp, hp, cp, c, num_layers) = prepare_params(params, f_in)

    x_b = jnp.pad(x, ((0, 0), (0, fp - f_in))).astype(jnp.bfloat16)
    adj_b = adj.astype(jnp.bfloat16)

    inputs = (x_b, adj_b, pp["w_in"], pp["b_in"], pp["w_cat"], pp["b_fused"],
              pp["w_out"], pp["b_out"], pp["lw"])

    flops = 2 * (n * fp * hp
                 + num_layers * (n * n * hp + n * (2 * hp) * hp)
                 + n * hp * cp)
    bytes_accessed = sum(int(a.size) * a.dtype.itemsize for a in inputs) + n * cp * 4

    in_specs = [
        pl.BlockSpec((n, fp), lambda i: (0, 0)),               # x        (resident)
        pl.BlockSpec((n, n), lambda i: (0, 0)),                # adj      (resident)
        pl.BlockSpec((fp, hp), lambda i: (0, 0)),              # w_in     (resident)
        pl.BlockSpec((1, hp), lambda i: (0, 0)),               # b_in     (resident)
        pl.BlockSpec((1, 2 * hp, hp), lambda i: (i, 0, 0)),    # w_cat    (per-layer, pipelined)
        pl.BlockSpec((1, 1, hp), lambda i: (i, 0, 0)),         # b_fused  (per-layer)
        pl.BlockSpec((hp, cp), lambda i: (0, 0)),              # w_out    (resident)
        pl.BlockSpec((1, cp), lambda i: (0, 0)),               # b_out    (resident)
        pl.BlockSpec(memory_space=pltpu.MemorySpace.SMEM),     # lw = softmax(weights)
    ]

    out_padded = pl.pallas_call(
        sage_res_kernel,
        out_shape=jax.ShapeDtypeStruct((n, cp), jnp.float32),
        grid_spec=pltpu.PrefetchScalarGridSpec(
            num_scalar_prefetch=0,
            grid=(num_layers,),
            in_specs=in_specs,
            out_specs=pl.BlockSpec((n, cp), lambda i: (0, 0)),
            scratch_shapes=[
                pltpu.VMEM((n, hp), jnp.float32),        # h   (carried across layers)
                pltpu.VMEM((n, hp), jnp.float32),        # 0.2 * input_fc(x)
                pltpu.VMEM((n, hp), jnp.float32),        # weighted layer-output accumulator
                pltpu.VMEM((n, 2 * hp), jnp.bfloat16),   # [agg | h] for fused K=2H matmul
            ]),
        compiler_params=pltpu.CompilerParams(
            dimension_semantics=("arbitrary",),          # layers are sequential
            vmem_limit_bytes=32 * 1024 * 1024),
        cost_estimate=pl.CostEstimate(
            flops=flops,
            transcendentals=n * (cp + 1),
            bytes_accessed=bytes_accessed),
    )(*inputs)

    return out_padded[:, :c]   # drop padded class columns (lane-dense store in kernel)


def sage_res_reference(x, adj, p):
    """Pure-JAX f32 reference (HIGHEST precision) of the original module semantics."""
    dot = functools.partial(jnp.dot, preferred_element_type=jnp.float32,
                            precision=jax.lax.Precision.HIGHEST)
    h = dot(x, p["w_in"]) + p["b_in"]
    x_in = h
    prev = None
    acc = jnp.zeros_like(h)
    for i in range(p["wl"].shape[0]):
        agg = dot(adj, h)
        hn = dot(agg, p["wl"][i]) + p["bl"][i] + dot(h, p["wr"][i])
        hn = (hn - p["rmean"][i]) * jax.lax.rsqrt(p["rvar"][i] + BN_EPS) * p["gamma"][i] \
             + p["beta"][i]
        hn = jnp.maximum(hn, 0.0)
        if i == 0:
            hn = hn + RES_IN * x_in
        else:
            hn = hn + RES_IN * x_in + RES_PREV * prev
        prev = hn
        h = hn
        acc = acc + p["lw"][i] * hn
    logits = dot(acc, p["w_out"]) + p["b_out"]
    return jax.nn.log_softmax(logits, axis=1)


def init_params(key, f_in, hidden, n_classes, num_layers):
    ks = jax.random.split(key, 14)

    def lin(k, fan_in, shape):
        return jax.random.normal(k, shape, jnp.float32) / math.sqrt(fan_in)

    params = {
        "w_in":  lin(ks[0], f_in,   (f_in, hidden)),
        "b_in":  lin(ks[1], f_in,   (1, hidden)),
        "wl":    lin(ks[2], hidden, (num_layers, hidden, hidden)),
        "wr":    lin(ks[3], hidden, (num_layers, hidden, hidden)),
        "bl":    lin(ks[4], hidden, (num_layers, hidden)),
        "gamma": 1.0 + 0.1 * jax.random.normal(ks[5], (num_layers, hidden), jnp.float32),
        "beta":  0.1 * jax.random.normal(ks[6], (num_layers, hidden), jnp.float32),
        "rmean": 0.1 * jax.random.normal(ks[7], (num_layers, hidden), jnp.float32),
        "rvar":  0.5 + jax.random.uniform(ks[8], (num_layers, hidden), jnp.float32),
        "w_out": lin(ks[9], hidden, (hidden, n_classes)),
        "b_out": lin(ks[10], hidden, (1, n_classes)),
        # self.weights parameter, softmaxed (tiny, done as parameter setup)
        "lw":    jax.nn.softmax(jax.random.normal(ks[11], (num_layers,), jnp.float32)),
    }
    return params, ks[12], ks[13]


if __name__ == "__main__":
    N, F_IN, HIDDEN, CLASSES, LAYERS = 128, 32, 32, 16, 6

    key = jax.random.PRNGKey(0)
    params, k_x, k_adj = init_params(key, F_IN, HIDDEN, CLASSES, LAYERS)

    x = jax.random.normal(k_x, (N, F_IN), jnp.float32)

    # Dense stand-in for the SparseTensor adj_t: random graph, row-normalized (mean aggr).
    edges = jax.random.bernoulli(k_adj, 0.1, (N, N)).astype(jnp.float32)
    edges = edges.at[jnp.arange(N), jnp.arange(N)].set(1.0)   # avoid isolated nodes
    adj = edges / jnp.sum(edges, axis=1, keepdims=True)

    out = jax.block_until_ready(sage_res_forward(x, adj, params))
    ref = jax.block_until_ready(sage_res_reference(x, adj, params))

    assert out.shape == (N, CLASSES)
    assert bool(jnp.all(jnp.isfinite(out)))
    # each row of exp(log_softmax) must sum to 1
    assert bool(jnp.allclose(jnp.sum(jnp.exp(out), axis=1), 1.0, atol=1e-3))
    # bf16 matmul operands (f32 accumulation) vs f32 HIGHEST-precision reference
    assert bool(jnp.allclose(out, ref, atol=2e-2, rtol=2e-2)), \
        f"max abs diff {float(jnp.max(jnp.abs(out - ref)))}"
    print("KERNEL_OK")
</pallas_src>

<mosaic_0001>
module attributes {stable_mosaic.version = 11 : i64} {
  func.func @sage_res_kernel(%arg0: i32, %arg1: memref<128x128xbf16, #tpu.memory_space<vmem>>, %arg2: memref<128x128xbf16, #tpu.memory_space<vmem>>, %arg3: memref<128x128xbf16, #tpu.memory_space<vmem>>, %arg4: memref<1x128xf32, #tpu.memory_space<vmem>>, %arg5: memref<1x256x128xbf16, #tpu.memory_space<vmem>>, %arg6: memref<1x1x128xf32, #tpu.memory_space<vmem>>, %arg7: memref<128x128xbf16, #tpu.memory_space<vmem>>, %arg8: memref<1x128xf32, #tpu.memory_space<vmem>>, %arg9: memref<6xf32, #tpu.memory_space<smem>>, %arg10: memref<128x128xf32, #tpu.memory_space<vmem>>, %arg11: memref<128x128xf32, #tpu.memory_space<vmem>>, %arg12: memref<128x128xf32, #tpu.memory_space<vmem>>, %arg13: memref<128x128xf32, #tpu.memory_space<vmem>>, %arg14: memref<128x256xbf16, #tpu.memory_space<vmem>>) attributes {dimension_semantics = [#tpu.dimension_semantics<arbitrary>], iteration_bounds = array<i64: 6>, scalar_prefetch = 0 : i64, scratch_operands = 4 : i64, tpu.core_type = #tpu.core_type<tc>, window_params = [{pipeline_mode = #tpu.pipeline_mode<synchronous>, transform_indices = @transform_0, window_bounds = array<i64: 128, 128>}, {pipeline_mode = #tpu.pipeline_mode<synchronous>, transform_indices = @transform_1, window_bounds = array<i64: 128, 128>}, {pipeline_mode = #tpu.pipeline_mode<synchronous>, transform_indices = @transform_2, window_bounds = array<i64: 128, 128>}, {pipeline_mode = #tpu.pipeline_mode<synchronous>, transform_indices = @transform_3, window_bounds = array<i64: 1, 128>}, {transform_indices = @transform_4, window_bounds = array<i64: 1, 256, 128>}, {transform_indices = @transform_5, window_bounds = array<i64: 1, 1, 128>}, {pipeline_mode = #tpu.pipeline_mode<synchronous>, transform_indices = @transform_6, window_bounds = array<i64: 128, 128>}, {pipeline_mode = #tpu.pipeline_mode<synchronous>, transform_indices = @transform_7, window_bounds = array<i64: 1, 128>}, {transform_indices = @transform_8, window_bounds = array<i64: 6>}, {pipeline_mode = #tpu.pipeline_mode<synchronous>, transform_indices = @transform_9, window_bounds = array<i64: 128, 128>}]} {
    %c0_i32 = arith.constant 0 : i32
    %0 = arith.cmpi eq, %arg0, %c0_i32 : i32
    %1 = arith.extui %0 : i1 to i32
    %c0_i32_0 = arith.constant 0 : i32
    %2 = arith.cmpi ne, %1, %c0_i32_0 : i32
    scf.if %2 {
      %c0_29 = arith.constant 0 : index
      %c0_30 = arith.constant 0 : index
      %38 = vector.load %arg1[%c0_29, %c0_30] : memref<128x128xbf16, #tpu.memory_space<vmem>>, vector<128x128xbf16>
      %c0_31 = arith.constant 0 : index
      %c0_32 = arith.constant 0 : index
      %39 = vector.load %arg3[%c0_31, %c0_32] : memref<128x128xbf16, #tpu.memory_space<vmem>>, vector<128x128xbf16>
      %cst_33 = arith.constant dense<0.000000e+00> : vector<128x128xf32>
      %40 = tpu.matmul %38, %39, %cst_33 {dimension_numbers = #tpu.dot_dimension_numbers<[1], [0], [0], [1], [0, 0, 1, 1], [], []>} : vector<128x128xbf16>, vector<128x128xbf16>, vector<128x128xf32> -> vector<128x128xf32>
      %c0_34 = arith.constant 0 : index
      %c0_35 = arith.constant 0 : index
      %41 = vector.load %arg4[%c0_34, %c0_35] : memref<1x128xf32, #tpu.memory_space<vmem>>, vector<1x128xf32>
      %42 = vector.broadcast %41 : vector<1x128xf32> to vector<128x128xf32>
      %43 = arith.addf %40, %42 : vector<128x128xf32>
      %c0_36 = arith.constant 0 : index
      %c0_37 = arith.constant 0 : index
      %44 = vector.load %arg11[%c0_36, %c0_37] : memref<128x128xf32, #tpu.memory_space<vmem>>, vector<128x128xf32>
      tpu.vector_store %arg11[%c0_36, %c0_37], %43 {strides = array<i32>} : memref<128x128xf32, #tpu.memory_space<vmem>>, vector<128x128xf32>,
      %cst_38 = arith.constant 2.000000e-01 : f32
      %45 = vector.broadcast %cst_38 : f32 to vector<128x128xf32>
      %46 = arith.mulf %45, %43 : vector<128x128xf32>
      %c0_39 = arith.constant 0 : index
      %c0_40 = arith.constant 0 : index
      %47 = vector.load %arg12[%c0_39, %c0_40] : memref<128x128xf32, #tpu.memory_space<vmem>>, vector<128x128xf32>
      tpu.vector_store %arg12[%c0_39, %c0_40], %46 {strides = array<i32>} : memref<128x128xf32, #tpu.memory_space<vmem>>, vector<128x128xf32>,
      %cst_41 = arith.constant 0.000000e+00 : f32
      %48 = vector.broadcast %cst_41 : f32 to vector<128x128xf32>
      %c0_42 = arith.constant 0 : index
      %c0_43 = arith.constant 0 : index
      %49 = vector.load %arg13[%c0_42, %c0_43] : memref<128x128xf32, #tpu.memory_space<vmem>>, vector<128x128xf32>
      tpu.vector_store %arg13[%c0_42, %c0_43], %48 {strides = array<i32>} : memref<128x128xf32, #tpu.memory_space<vmem>>, vector<128x128xf32>,
    } else {
    }
    %c0 = arith.constant 0 : index
    %c0_1 = arith.constant 0 : index
    %3 = vector.load %arg11[%c0, %c0_1] : memref<128x128xf32, #tpu.memory_space<vmem>>, vector<128x128xf32>
    %4 = arith.truncf %3 : vector<128x128xf32> to vector<128x128xbf16>
    %c0_2 = arith.constant 0 : index
    %c0_3 = arith.constant 0 : index
    %5 = vector.load %arg2[%c0_2, %c0_3] : memref<128x128xbf16, #tpu.memory_space<vmem>>, vector<128x128xbf16>
    %cst = arith.constant dense<0.000000e+00> : vector<128x128xf32>
    %6 = tpu.matmul %5, %4, %cst {dimension_numbers = #tpu.dot_dimension_numbers<[1], [0], [0], [1], [0, 0, 1, 1], [], []>} : vector<128x128xbf16>, vector<128x128xbf16>, vector<128x128xf32> -> vector<128x128xf32>
    %7 = arith.truncf %6 : vector<128x128xf32> to vector<128x128xbf16>
    %c0_4 = arith.constant 0 : index
    %c0_5 = arith.constant 0 : index
    %8 = vector.load %arg14[%c0_4, %c0_5] : memref<128x256xbf16, #tpu.memory_space<vmem>>, vector<128x128xbf16>
    tpu.vector_store %arg14[%c0_4, %c0_5], %7 {strides = array<i32>} : memref<128x256xbf16, #tpu.memory_space<vmem>>, vector<128x128xbf16>,
    %c0_6 = arith.constant 0 : index
    %c128 = arith.constant 128 : index
    %9 = vector.load %arg14[%c0_6, %c128] : memref<128x256xbf16, #tpu.memory_space<vmem>>, vector<128x128xbf16>
    tpu.vector_store %arg14[%c0_6, %c128], %4 {strides = array<i32>} : memref<128x256xbf16, #tpu.memory_space<vmem>>, vector<128x128xbf16>,
    %c0_7 = arith.constant 0 : index
    %c0_8 = arith.constant 0 : index
    %10 = vector.load %arg14[%c0_7, %c0_8] : memref<128x256xbf16, #tpu.memory_space<vmem>>, vector<128x256xbf16>
    %c0_9 = arith.constant 0 : index
    %c0_10 = arith.constant 0 : index
    %c0_11 = arith.constant 0 : index
    %11 = vector.load %arg5[%c0_9, %c0_10, %c0_11] : memref<1x256x128xbf16, #tpu.memory_space<vmem>>, vector<1x256x128xbf16>
    %12 = vector.shape_cast %11 : vector<1x256x128xbf16> to vector<256x128xbf16>
    %cst_12 = arith.constant dense<0.000000e+00> : vector<128x128xf32>
    %13 = tpu.matmul %10, %12, %cst_12 {dimension_numbers = #tpu.dot_dimension_numbers<[1], [0], [0], [1], [0, 0, 1, 1], [], []>} : vector<128x256xbf16>, vector<256x128xbf16>, vector<128x128xf32> -> vector<128x128xf32>
    %c0_13 = arith.constant 0 : index
    %c0_14 = arith.constant 0 : index
    %c0_15 = arith.constant 0 : index
    %14 = vector.load %arg6[%c0_13, %c0_14, %c0_15] : memref<1x1x128xf32, #tpu.memory_space<vmem>>, vector<1x1x128xf32>
    %15 = vector.shape_cast %14 : vector<1x1x128xf32> to vector<1x128xf32>
    %16 = vector.broadcast %15 : vector<1x128xf32> to vector<128x128xf32>
    %17 = arith.addf %13, %16 : vector<128x128xf32>
    %cst_16 = arith.constant 0.000000e+00 : f32
    %18 = vector.broadcast %cst_16 : f32 to vector<128x128xf32>
    %19 = arith.maximumf %17, %18 : vector<128x128xf32>
    %c0_i32_17 = arith.constant 0 : i32
    %20 = arith.cmpi sgt, %arg0, %c0_i32_17 : i32
    %cst_18 = arith.constant 5.000000e-01 : f32
    %cst_19 = arith.constant 0.000000e+00 : f32
    %21 = arith.select %20, %cst_18, %cst_19 : f32
    %c0_20 = arith.constant 0 : index
    %c0_21 = arith.constant 0 : index
    %22 = vector.load %arg12[%c0_20, %c0_21] : memref<128x128xf32, #tpu.memory_space<vmem>>, vector<128x128xf32>
    %23 = arith.addf %19, %22 : vector<128x128xf32>
    %24 = vector.broadcast %21 : f32 to vector<128x128xf32>
    %25 = arith.mulf %24, %3 : vector<128x128xf32>
    %26 = arith.addf %23, %25 : vector<128x128xf32>
    %c0_22 = arith.constant 0 : index
    %c0_23 = arith.constant 0 : index
    %27 = vector.load %arg11[%c0_22, %c0_23] : memref<128x128xf32, #tpu.memory_space<vmem>>, vector<128x128xf32>
    tpu.vector_store %arg11[%c0_22, %c0_23], %26 {strides = array<i32>} : memref<128x128xf32, #tpu.memory_space<vmem>>, vector<128x128xf32>,
    %c0_24 = arith.constant 0 : index
    %c0_25 = arith.constant 0 : index
    %28 = vector.load %arg13[%c0_24, %c0_25] : memref<128x128xf32, #tpu.memory_space<vmem>>, vector<128x128xf32>
    %29 = arith.index_cast %arg0 : i32 to index
    %30 = memref.load %arg9[%29] : memref<6xf32, #tpu.memory_space<smem>>
    %31 = vector.broadcast %30 : f32 to vector<128x128xf32>
    %32 = arith.mulf %31, %26 : vector<128x128xf32>
    %33 = arith.addf %28, %32 : vector<128x128xf32>
    %c0_26 = arith.constant 0 : index
    %c0_27 = arith.constant 0 : index
    %34 = vector.load %arg13[%c0_26, %c0_27] : memref<128x128xf32, #tpu.memory_space<vmem>>, vector<128x128xf32>
    tpu.vector_store %arg13[%c0_26, %c0_27], %33 {strides = array<i32>} : memref<128x128xf32, #tpu.memory_space<vmem>>, vector<128x128xf32>,
    %c5_i32 = arith.constant 5 : i32
    %35 = arith.cmpi eq, %arg0, %c5_i32 : i32
    %36 = arith.extui %35 : i1 to i32
    %c0_i32_28 = arith.constant 0 : i32
    %37 = arith.cmpi ne, %36, %c0_i32_28 : i32
    scf.if %37 {
      %c0_29 = arith.constant 0 : index
      %c0_30 = arith.constant 0 : index
      %38 = vector.load %arg13[%c0_29, %c0_30] : memref<128x128xf32, #tpu.memory_space<vmem>>, vector<128x128xf32>
      %39 = arith.truncf %38 : vector<128x128xf32> to vector<128x128xbf16>
      %c0_31 = arith.constant 0 : index
      %c0_32 = arith.constant 0 : index
      %40 = vector.load %arg7[%c0_31, %c0_32] : memref<128x128xbf16, #tpu.memory_space<vmem>>, vector<128x128xbf16>
      %cst_33 = arith.constant dense<0.000000e+00> : vector<128x128xf32>
      %41 = tpu.matmul %39, %40, %cst_33 {dimension_numbers = #tpu.dot_dimension_numbers<[1], [0], [0], [1], [0, 0, 1, 1], [], []>} : vector<128x128xbf16>, vector<128x128xbf16>, vector<128x128xf32> -> vector<128x128xf32>
      %c0_34 = arith.constant 0 : index
      %c0_35 = arith.constant 0 : index
      %42 = vector.load %arg8[%c0_34, %c0_35] : memref<1x128xf32, #tpu.memory_space<vmem>>, vector<1x128xf32>
      %43 = vector.broadcast %42 : vector<1x128xf32> to vector<128x128xf32>
      %44 = arith.addf %41, %43 : vector<128x128xf32>
      %cst_36 = arith.constant dense<0xFF800000> : vector<128xf32>
      %45 = vector.multi_reduction <maximumf>, %44, %cst_36 [1] : vector<128x128xf32> to vector<128xf32>
      %46 = vector.shape_cast %45 : vector<128xf32> to vector<128x1xf32>
      %47 = vector.broadcast %46 : vector<128x1xf32> to vector<128x128xf32>
      %48 = arith.subf %44, %47 : vector<128x128xf32>
      %49 = math.exp %48 : vector<128x128xf32>
      %cst_37 = arith.constant dense<0.000000e+00> : vector<128xf32>
      %50 = vector.multi_reduction <add>, %49, %cst_37 [1] : vector<128x128xf32> to vector<128xf32>
      %51 = vector.shape_cast %50 : vector<128xf32> to vector<128x1xf32>
      %52 = math.log %51 : vector<128x1xf32>
      %53 = vector.broadcast %52 : vector<128x1xf32> to vector<128x128xf32>
      %54 = arith.subf %48, %53 : vector<128x128xf32>
      %c0_38 = arith.constant 0 : index
      %c0_39 = arith.constant 0 : index
      %55 = vector.load %arg10[%c0_38, %c0_39] : memref<128x128xf32, #tpu.memory_space<vmem>>, vector<128x128xf32>
      tpu.vector_store %arg10[%c0_38, %c0_39], %54 {strides = array<i32>} : memref<128x128xf32, #tpu.memory_space<vmem>>, vector<128x128xf32>,
    } else {
    }
    return
  }
  func.func @transform_0(%arg0: i32) -> (i32, i32) {
    %c0_i32 = arith.constant 0 : i32
    %c0_i32_0 = arith.constant 0 : i32
    %c0_i32_1 = arith.constant 0 : i32
    return %c0_i32, %c0_i32_0 : i32, i32
  }
  func.func @transform_1(%arg0: i32) -> (i32, i32) {
    %c0_i32 = arith.constant 0 : i32
    %c0_i32_0 = arith.constant 0 : i32
    %c0_i32_1 = arith.constant 0 : i32
    return %c0_i32, %c0_i32_0 : i32, i32
  }
  func.func @transform_2(%arg0: i32) -> (i32, i32) {
    %c0_i32 = arith.constant 0 : i32
    %c0_i32_0 = arith.constant 0 : i32
    %c0_i32_1 = arith.constant 0 : i32
    return %c0_i32, %c0_i32_0 : i32, i32
  }
  func.func @transform_3(%arg0: i32) -> (i32, i32) {
    %c0_i32 = arith.constant 0 : i32
    %c0_i32_0 = arith.constant 0 : i32
    %c0_i32_1 = arith.constant 0 : i32
    return %c0_i32, %c0_i32_0 : i32, i32
  }
  func.func @transform_4(%arg0: i32) -> (i32, i32, i32) {
    %c0_i32 = arith.constant 0 : i32
    %c0_i32_0 = arith.constant 0 : i32
    %c0_i32_1 = arith.constant 0 : i32
    return %arg0, %c0_i32, %c0_i32_0 : i32, i32, i32
  }
  func.func @transform_5(%arg0: i32) -> (i32, i32, i32) {
    %c0_i32 = arith.constant 0 : i32
    %c0_i32_0 = arith.constant 0 : i32
    %c0_i32_1 = arith.constant 0 : i32
    return %arg0, %c0_i32, %c0_i32_0 : i32, i32, i32
  }
  func.func @transform_6(%arg0: i32) -> (i32, i32) {
    %c0_i32 = arith.constant 0 : i32
    %c0_i32_0 = arith.constant 0 : i32
    %c0_i32_1 = arith.constant 0 : i32
    return %c0_i32, %c0_i32_0 : i32, i32
  }
  func.func @transform_7(%arg0: i32) -> (i32, i32) {
    %c0_i32 = arith.constant 0 : i32
    %c0_i32_0 = arith.constant 0 : i32
    %c0_i32_1 = arith.constant 0 : i32
    return %c0_i32, %c0_i32_0 : i32, i32
  }
  func.func @transform_8(%arg0: i32) -> i32 {
    %c0_i32 = arith.constant 0 : i32
    %c0_i32_0 = arith.constant 0 : i32
    return %c0_i32 : i32
  }
  func.func @transform_9(%arg0: i32) -> (i32, i32) {
    %c0_i32 = arith.constant 0 : i32
    %c0_i32_0 = arith.constant 0 : i32
    %c0_i32_1 = arith.constant 0 : i32
    return %c0_i32, %c0_i32_0 : i32, i32
  }
}

</mosaic_0001>

<llo_original>
// kernel: tpu_custom_call.1
$region0: #{tpu_custom_call.1}
  #allocation0 [shape = 'u32[]', space=smem, size = 0x4, offset = 0x4, fixed_abs, tag = 'smem constant byte address 0x4 - core index']
  #allocation1 [shape = 'u32[144,128]{1,0:T(1,128)}', space=vmem, size = 0x12000, scoped, tag = 'internal scratch']
  #allocation2 [shape = 'f32[128,128]{1,0:T(8,128)}', space=vmem, size = 0x10000, scoped, tag = 'scratch operand']
  #allocation3 [shape = 'f32[128,128]{1,0:T(8,128)}', space=vmem, size = 0x10000, scoped, tag = 'scratch operand']
  #allocation4 [shape = 'f32[128,128]{1,0:T(8,128)}', space=vmem, size = 0x10000, scoped, tag = 'scratch operand']
  #allocation5 [shape = 'bf16[128,256]{1,0:T(16,128)(2,1)}', space=vmem, size = 0x10000, scoped, tag = 'scratch operand']
  %s0 = inlined_call_operand.hbm [shape: bf16[128,128], index: 0, kind: input, shape index: {}]
  %s1 = inlined_call_operand.hbm [shape: bf16[128,128], index: 1, kind: input, shape index: {}]
  %s2 = inlined_call_operand.hbm [shape: bf16[128,128], index: 2, kind: input, shape index: {}]
  %s3 = inlined_call_operand.vmem [shape: f32[1,128], index: 3, kind: input, shape index: {}]
  %s4 = inlined_call_operand.hbm [shape: bf16[6,256,128], index: 4, kind: input, shape index: {}]
  %s5 = inlined_call_operand.vmem [shape: f32[6,1,128], index: 5, kind: input, shape index: {}]
  %s6 = inlined_call_operand.hbm [shape: bf16[128,128], index: 6, kind: input, shape index: {}]
  %s7 = inlined_call_operand.vmem [shape: f32[1,128], index: 7, kind: input, shape index: {}]
  %s8 = inlined_call_operand.vmem [shape: f32[6], index: 8, kind: input, shape index: {}]
  %s9 = inlined_call_operand.hbm [shape: f32[128,128], index: 9, kind: output, shape index: {}]
  %s10 = sld [smem:[#allocation0]]
  $region101: #{tpu_custom_call.1} parent=0
    _
  %s12 = ssub.s32 1, %s10
  %s13 = scalar_select 0, %s12, %s10
  $region1: #{tpu_custom_call.1} parent=0
    #allocation6 [shape = 'u8[32768]{0}', space=vmem, size = 0x8000, scoped, tag = 'input window, operand 0, single buffered']
    #allocation7 [shape = 's32[2]{0}', space=sflag, size = 0x8, scoped, tag = 'scoped memory for tpu_custom_call.1']
    #allocation8 [shape = 's32[2]{0}', space=sflag, size = 0x8, scoped, tag = 'scoped memory for tpu_custom_call.1']
    #allocation9 [shape = 's32[2]{0}', space=sflag, size = 0x8, scoped, tag = 'scoped memory for tpu_custom_call.1']
    #allocation10 [shape = 'u8[32768]{0}', space=vmem, size = 0x8000, scoped, tag = 'input window, operand 1, single buffered']
    #allocation11 [shape = 's32[1]{0}', space=sflag, size = 0x4, scoped, tag = 'scoped memory for tpu_custom_call.1']
    #allocation12 [shape = 'u8[32768]{0}', space=vmem, size = 0x8000, scoped, tag = 'input window, operand 2, single buffered']
    #allocation13 [shape = 'u8[131072]{0}', space=vmem, size = 0x20000, scoped, tag = 'input window, operand 4']
    #allocation14 [shape = 's32[2]{0}', space=sflag, size = 0x8, scoped, tag = 'scoped memory for tpu_custom_call.1']
    #allocation15 [shape = 'u8[32768]{0}', space=vmem, size = 0x8000, scoped, tag = 'input window, operand 6, single buffered']
    #allocation16 [shape = 'u8[512]{0}', space=smem, size = 0x200, scoped, tag = 'input window, operand 8, single buffered']
    #allocation17 [shape = 'u8[65536]{0}', space=vmem, size = 0x10000, scoped, tag = 'output window, operand 0, single buffered']
    %14 = vsyncpa [#allocation7], 0
    %15 = vsyncpa [#allocation11], 0
    %16 = vsyncpa [#allocation14], 0
    %s17 = scalar_lea.sflag [#allocation14], 1
    %18 = vsyncpa %s17, 0
    %19 = vsyncpa [#allocation9], 0
    %20 = vsyncpa [#allocation8], 0
    loop: start=0, step=1, limit=8
    $region2: #{tpu_custom_call.1} parent=1 // loop_pre_header
      _
    $region3: #{tpu_custom_call.1} parent=1 // loop_header
      %s22 = sphi 0, %s26
      %p23 = scmp.ge.s32.totalorder %s22, 8
      %s30 = sphi 0, %s30
      %s32 = sphi 0, %s30
      %s33 = sphi 0, %s32
      %s47 = sphi 0, %s33
      %s51 = sphi 0, %s51
      %s53 = sphi 0, %s51
      %s54 = sphi 0, %s53
      %s68 = sphi 0, %s54
      %s72 = sphi 0, %s72
      %s74 = sphi 0, %s72
      %s75 = sphi 0, %s74
      %s89 = sphi 0, %s75
      %s93 = sphi 0, %s93
      %s95 = sphi 0, %s93
      %s96 = sphi 0, %s95
      %s110 = sphi 0, %s96
      %s116 = sphi 0, %s118
      %s119 = sphi 0, %s116
      %s120 = sphi 0, %s119
      %s136 = sphi 0, %s120
      %s142 = sphi 0, %s144
      %s145 = sphi 0, %s142
      %s146 = sphi 0, %s145
      %s162 = sphi 0, %s146
      %s166 = sphi 0, %s166
      %s168 = sphi 0, %s166
      %s169 = sphi 0, %s168
      %s183 = sphi 0, %s169
      %s187 = sphi 0, %s187
      %s189 = sphi 0, %s187
      %s190 = sphi 0, %s189
      %s204 = sphi 0, %s190
      %s208 = sphi 0, %s208
      %s210 = sphi 0, %s208
      %s211 = sphi 0, %s210
      %s225 = sphi 0, %s211
      %s229 = sphi 0, %s229
      %s231 = sphi 0, %s229
      %s232 = sphi 0, %s231
      %s246 = sphi 0, %s232
    $region4: #{tpu_custom_call.1} parent=1 // loop_header_branch
      %25 = sbr.rel (%p23) target = $region8
    $region5: #{tpu_custom_call.1} parent=1 // loop_body
      %s27 = ssub.s32 %s22, 1
      %s28 = ssub.s32 %s22, 2
      %s29 = sadd.s32 %s22, 1
      %s31 = sadd.s32 %s30, 1
      %p34 = scmp.eq.s32.totalorder %s22, 5
      %p35 = scmp.ne.s32.totalorder %s30, %s32
      %p36 = scmp.eq.s32.totalorder %s22, 0
      %p37 = por %p35, %p36
      %p38 = scmp.ne.s32.totalorder %s30, %s32
      %p39 = scmp.eq.s32.totalorder %s27, 5
      %p40 = por %p38, %p39
      %p41 = scmp.ne.s32.totalorder %s32, %s33
      %p42 = scmp.eq.s32.totalorder %s27, 0
      %p43 = por %p41, %p42
      %p44 = scmp.ne.s32.totalorder %s32, %s33
      %p45 = scmp.eq.s32.totalorder %s28, 5
      %p46 = por %p44, %p45
      %p48 = scmp.ne.s32.totalorder %s33, %s47
      %p49 = scmp.eq.s32.totalorder %s28, 0
      %p50 = por %p48, %p49
      %s52 = sadd.s32 %s51, 1
      %p55 = scmp.eq.s32.totalorder %s22, 5
      %p56 = scmp.ne.s32.totalorder %s51, %s53
      %p57 = scmp.eq.s32.totalorder %s22, 0
      %p58 = por %p56, %p57
      %p59 = scmp.ne.s32.totalorder %s51, %s53
      %p60 = scmp.eq.s32.totalorder %s27, 5
      %p61 = por %p59, %p60
      %p62 = scmp.ne.s32.totalorder %s53, %s54
      %p63 = scmp.eq.s32.totalorder %s27, 0
      %p64 = por %p62, %p63
      %p65 = scmp.ne.s32.totalorder %s53, %s54
      %p66 = scmp.eq.s32.totalorder %s28, 5
      %p67 = por %p65, %p66
      %p69 = scmp.ne.s32.totalorder %s54, %s68
      %p70 = scmp.eq.s32.totalorder %s28, 0
      %p71 = por %p69, %p70
      %s73 = sadd.s32 %s72, 1
      %p76 = scmp.eq.s32.totalorder %s22, 5
      %p77 = scmp.ne.s32.totalorder %s72, %s74
      %p78 = scmp.eq.s32.totalorder %s22, 0
      %p79 = por %p77, %p78
      %p80 = scmp.ne.s32.totalorder %s72, %s74
      %p81 = scmp.eq.s32.totalorder %s27, 5
      %p82 = por %p80, %p81
      %p83 = scmp.ne.s32.totalorder %s74, %s75
      %p84 = scmp.eq.s32.totalorder %s27, 0
      %p85 = por %p83, %p84
      %p86 = scmp.ne.s32.totalorder %s74, %s75
      %p87 = scmp.eq.s32.totalorder %s28, 5
      %p88 = por %p86, %p87
      %p90 = scmp.ne.s32.totalorder %s75, %s89
      %p91 = scmp.eq.s32.totalorder %s28, 0
      %p92 = por %p90, %p91
      %s94 = sadd.s32 %s93, 1
      %p97 = scmp.eq.s32.totalorder %s22, 5
      %p98 = scmp.ne.s32.totalorder %s93, %s95
      %p99 = scmp.eq.s32.totalorder %s22, 0
      %p100 = por %p98, %p99
      %p101 = scmp.ne.s32.totalorder %s93, %s95
      %p102 = scmp.eq.s32.totalorder %s27, 5
      %p103 = por %p101, %p102
      %p104 = scmp.ne.s32.totalorder %s95, %s96
      %p105 = scmp.eq.s32.totalorder %s27, 0
      %p106 = por %p104, %p105
      %p107 = scmp.ne.s32.totalorder %s95, %s96
      %p108 = scmp.eq.s32.totalorder %s28, 5
      %p109 = por %p107, %p108
      %p111 = scmp.ne.s32.totalorder %s96, %s110
      %p112 = scmp.eq.s32.totalorder %s28, 0
      %p113 = por %p111, %p112
      %s114 = ssub.s32 %s22, %s29
      %p115 = scmp.eq.s32.totalorder %s114, 0
      %s117 = sadd.s32 %s116, 1
      %s118 = scalar_select %p115, %s116, %s117
      %p121 = pneg %p115
      %p122 = scmp.eq.s32.totalorder %s22, 5
      %p123 = por %p121, %p122
      %p124 = scmp.ne.s32.totalorder %s116, %s119
      %p125 = scmp.eq.s32.totalorder %s22, 0
      %p126 = por %p124, %p125
      %p127 = scmp.ne.s32.totalorder %s116, %s119
      %p128 = scmp.eq.s32.totalorder %s27, 5
      %p129 = por %p127, %p128
      %p130 = scmp.ne.s32.totalorder %s119, %s120
      %p131 = scmp.eq.s32.totalorder %s27, 0
      %p132 = por %p130, %p131
      %p133 = scmp.ne.s32.totalorder %s119, %s120
      %p134 = scmp.eq.s32.totalorder %s28, 5
      %p135 = por %p133, %p134
      %p137 = scmp.ne.s32.totalorder %s120, %s136
      %p138 = scmp.eq.s32.totalorder %s28, 0
      %p139 = por %p137, %p138
      %s140 = ssub.s32 %s22, %s29
      %p141 = scmp.eq.s32.totalorder %s140, 0
      %s143 = sadd.s32 %s142, 1
      %s144 = scalar_select %p141, %s142, %s143
      %p147 = pneg %p141
      %p148 = scmp.eq.s32.totalorder %s22, 5
      %p149 = por %p147, %p148
      %p150 = scmp.ne.s32.totalorder %s142, %s145
      %p151 = scmp.eq.s32.totalorder %s22, 0
      %p152 = por %p150, %p151
      %p153 = scmp.ne.s32.totalorder %s142, %s145
      %p154 = scmp.eq.s32.totalorder %s27, 5
      %p155 = por %p153, %p154
      %p156 = scmp.ne.s32.totalorder %s145, %s146
      %p157 = scmp.eq.s32.totalorder %s27, 0
      %p158 = por %p156, %p157
      %p159 = scmp.ne.s32.totalorder %s145, %s146
      %p160 = scmp.eq.s32.totalorder %s28, 5
      %p161 = por %p159, %p160
      %p163 = scmp.ne.s32.totalorder %s146, %s162
      %p164 = scmp.eq.s32.totalorder %s28, 0
      %p165 = por %p163, %p164
      %s167 = sadd.s32 %s166, 1
      %p170 = scmp.eq.s32.totalorder %s22, 5
      %p171 = scmp.ne.s32.totalorder %s166, %s168
      %p172 = scmp.eq.s32.totalorder %s22, 0
      %p173 = por %p171, %p172
      %p174 = scmp.ne.s32.totalorder %s166, %s168
      %p175 = scmp.eq.s32.totalorder %s27, 5
      %p176 = por %p174, %p175
      %p177 = scmp.ne.s32.totalorder %s168, %s169
      %p178 = scmp.eq.s32.totalorder %s27, 0
      %p179 = por %p177, %p178
      %p180 = scmp.ne.s32.totalorder %s168, %s169
      %p181 = scmp.eq.s32.totalorder %s28, 5
      %p182 = por %p180, %p181
      %p184 = scmp.ne.s32.totalorder %s169, %s183
      %p185 = scmp.eq.s32.totalorder %s28, 0
      %p186 = por %p184, %p185
      %s188 = sadd.s32 %s187, 1
      %p191 = scmp.eq.s32.totalorder %s22, 5
      %p192 = scmp.ne.s32.totalorder %s187, %s189
      %p193 = scmp.eq.s32.totalorder %s22, 0
      %p194 = por %p192, %p193
      %p195 = scmp.ne.s32.totalorder %s187, %s189
      %p196 = scmp.eq.s32.totalorder %s27, 5
      %p197 = por %p195, %p196
      %p198 = scmp.ne.s32.totalorder %s189, %s190
      %p199 = scmp.eq.s32.totalorder %s27, 0
      %p200 = por %p198, %p199
      %p201 = scmp.ne.s32.totalorder %s189, %s190
      %p202 = scmp.eq.s32.totalorder %s28, 5
      %p203 = por %p201, %p202
      %p205 = scmp.ne.s32.totalorder %s190, %s204
      %p206 = scmp.eq.s32.totalorder %s28, 0
      %p207 = por %p205, %p206
      %s209 = sadd.s32 %s208, 1
      %p212 = scmp.eq.s32.totalorder %s22, 5
      %p213 = scmp.ne.s32.totalorder %s208, %s210
      %p214 = scmp.eq.s32.totalorder %s22, 0
      %p215 = por %p213, %p214
      %p216 = scmp.ne.s32.totalorder %s208, %s210
      %p217 = scmp.eq.s32.totalorder %s27, 5
      %p218 = por %p216, %p217
      %p219 = scmp.ne.s32.totalorder %s210, %s211
      %p220 = scmp.eq.s32.totalorder %s27, 0
      %p221 = por %p219, %p220
      %p222 = scmp.ne.s32.totalorder %s210, %s211
      %p223 = scmp.eq.s32.totalorder %s28, 5
      %p224 = por %p222, %p223
      %p226 = scmp.ne.s32.totalorder %s211, %s225
      %p227 = scmp.eq.s32.totalorder %s28, 0
      %p228 = por %p226, %p227
      %s230 = sadd.s32 %s229, 1
      %p233 = scmp.eq.s32.totalorder %s22, 5
      %p234 = scmp.ne.s32.totalorder %s229, %s231
      %p235 = scmp.eq.s32.totalorder %s22, 0
      %p236 = por %p234, %p235
      %p237 = scmp.ne.s32.totalorder %s229, %s231
      %p238 = scmp.eq.s32.totalorder %s27, 5
      %p239 = por %p237, %p238
      %p240 = scmp.ne.s32.totalorder %s231, %s232
      %p241 = scmp.eq.s32.totalorder %s27, 0
      %p242 = por %p240, %p241
      %p243 = scmp.ne.s32.totalorder %s231, %s232
      %p244 = scmp.eq.s32.totalorder %s28, 5
      %p245 = por %p243, %p244
      %p247 = scmp.ne.s32.totalorder %s232, %s246
      %p248 = scmp.eq.s32.totalorder %s28, 0
      %p249 = por %p247, %p248
      %p250 = scmp.le.s32.totalorder 1, %s22
      %p251 = scmp.lt.s32.totalorder %s22, 7
      %p252 = pnand %p250, %p251
      %p253 = pneg %p252
      // Predicated region
      $region9: #{tpu_custom_call.1} parent=5 // pred_check
        _
      $region10: #{tpu_custom_call.1} parent=5 // pred_check_branch
        %255 = sbr.rel (%p252) target = $region12
      $region11: #{tpu_custom_call.1} parent=5 // pred_region
        %s256 = ssub.s32 %s22, 1
        // Predicated region
        $region13: #{tpu_custom_call.1} parent=11 // pred_check
          %p257 = pneg %p43
        $region14: #{tpu_custom_call.1} parent=11 // pred_check_branch
          %259 = sbr.rel (%p257) target = $region16
        $region15: #{tpu_custom_call.1} parent=11 // pred_region
          %s261 = ssub.s32 1024, 1024
          %262 = vsyncadd [#allocation7], %s261
          %s263 = sshll.u32 [#allocation6], 4
          %s264 = int_to_ptr.vmem [resolvable:$true] %s263
          %269 = dma.hbm_to_vmem [thread:$0]  %s0, 1024, %s264, [#allocation7], 64, 64, 4
        $region16: #{tpu_custom_call.1} parent=11 // pred_fallthru
          _
        // Predicated region
        $region17: #{tpu_custom_call.1} parent=11 // pred_check
          %p270 = pneg %p64
        $region18: #{tpu_custom_call.1} parent=11 // pred_check_branch
          %272 = sbr.rel (%p270) target = $region20
        $region19: #{tpu_custom_call.1} parent=11 // pred_region
          %s274 = ssub.s32 1024, 1024
          %275 = vsyncadd [#allocation11], %s274
          %s276 = sshll.u32 [#allocation10], 4
          %s277 = int_to_ptr.vmem [resolvable:$true] %s276
          %282 = dma.hbm_to_vmem [thread:$0]  %s1, 1024, %s277, [#allocation11], 64, 64, 4
        $region20: #{tpu_custom_call.1} parent=11 // pred_fallthru
          _
        // Predicated region
        $region21: #{tpu_custom_call.1} parent=11 // pred_check
          %p283 = pneg %p85
        $region22: #{tpu_custom_call.1} parent=11 // pred_check_branch
          %285 = sbr.rel (%p283) target = $region24
        $region23: #{tpu_custom_call.1} parent=11 // pred_region
          %s287 = ssub.s32 1024, 1024
          %288 = vsyncadd [#allocation11], %s287
          %s289 = sshll.u32 [#allocation12], 4
          %s290 = int_to_ptr.vmem [resolvable:$true] %s289
          %295 = dma.hbm_to_vmem [thread:$0]  %s2, 1024, %s290, [#allocation11], 64, 64, 4
        $region24: #{tpu_custom_call.1} parent=11 // pred_fallthru
          _
        // Predicated region
        $region25: #{tpu_custom_call.1} parent=11 // pred_check
          %p296 = pneg %p106
        $region26: #{tpu_custom_call.1} parent=11 // pred_check_branch
          %298 = sbr.rel (%p296) target = $region28
        $region27: #{tpu_custom_call.1} parent=11 // pred_region
          _
        $region28: #{tpu_custom_call.1} parent=11 // pred_fallthru
          _
        // Predicated region
        $region29: #{tpu_custom_call.1} parent=11 // pred_check
          %p299 = pneg %p179
        $region30: #{tpu_custom_call.1} parent=11 // pred_check_branch
          %301 = sbr.rel (%p299) target = $region32
        $region31: #{tpu_custom_call.1} parent=11 // pred_region
          %s303 = ssub.s32 1024, 1024
          %304 = vsyncadd [#allocation14], %s303
          %s305 = sshll.u32 [#allocation15], 4
          %s306 = int_to_ptr.vmem [resolvable:$true] %s305
          %311 = dma.hbm_to_vmem [thread:$0]  %s6, 1024, %s306, [#allocation14], 64, 64, 4
        $region32: #{tpu_custom_call.1} parent=11 // pred_fallthru
          _
        // Predicated region
        $region33: #{tpu_custom_call.1} parent=11 // pred_check
          %p312 = pneg %p200
        $region34: #{tpu_custom_call.1} parent=11 // pred_check_branch
          %314 = sbr.rel (%p312) target = $region36
        $region35: #{tpu_custom_call.1} parent=11 // pred_region
          _
        $region36: #{tpu_custom_call.1} parent=11 // pred_fallthru
          _
        // Predicated region
        $region37: #{tpu_custom_call.1} parent=11 // pred_check
          %p315 = pneg %p221
        $region38: #{tpu_custom_call.1} parent=11 // pred_check_branch
          %317 = sbr.rel (%p315) target = $region40
        $region39: #{tpu_custom_call.1} parent=11 // pred_region
          %s319 = ssub.s32 16, 16
          %320 = vsyncadd [#allocation9], %s319
          %s322 = sshll.u32 %s8, 4
          %s323 = int_to_ptr.vmem [resolvable:$true] %s322
          %325 = dma.vmem_to_smem %s323, 16, [#allocation16], [#allocation9]
        $region40: #{tpu_custom_call.1} parent=11 // pred_fallthru
          _
      $region12: #{tpu_custom_call.1} parent=5 // pred_fallthru
        _
      %p326 = scmp.lt.s32.totalorder %s22, 6
      // Predicated region
      $region41: #{tpu_custom_call.1} parent=5 // pred_check
        %p327 = pneg %p326
      $region42: #{tpu_custom_call.1} parent=5 // pred_check_branch
        %329 = sbr.rel (%p327) target = $region44
      $region43: #{tpu_custom_call.1} parent=5 // pred_region
        // Predicated region
        $region45: #{tpu_custom_call.1} parent=43 // pred_check
          %p330 = pneg %p126
        $region46: #{tpu_custom_call.1} parent=43 // pred_check_branch
          %332 = sbr.rel (%p330) target = $region48
        $region47: #{tpu_custom_call.1} parent=43 // pred_region
          %s333 = sand.u32 %s22, 1
          %s334 = scalar_lea.sflag [#allocation14], %s333
          %s335 = sand.u32 %s116, 1
          %s336 = smul.addr %s335, 128
          %s337 = scalar_lea.vmem [#allocation13], %s336
          %s339 = ssub.s32 2048, 2048
          %340 = vsyncadd %s334, %s339
          %s341 = smul.addr %s22, 32
          %s342 = smul.addr %s341, 64
          %s343 = scalar_lea.hbm %s4, %s342
          %s344 = sshll.u32 %s337, 4
          %s345 = int_to_ptr.vmem [resolvable:$true] %s344
          %350 = dma.hbm_to_vmem [thread:$0]  %s343, 2048, %s345, %s334, 64, 64, 4
        $region48: #{tpu_custom_call.1} parent=43 // pred_fallthru
          _
        // Predicated region
        $region49: #{tpu_custom_call.1} parent=43 // pred_check
          %p351 = pneg %p152
        $region50: #{tpu_custom_call.1} parent=43 // pred_check_branch
          %353 = sbr.rel (%p351) target = $region52
        $region51: #{tpu_custom_call.1} parent=43 // pred_region
          %p354 = scmp.lt.s32.totalorder %s22, 5
          %s355 = scalar_select %p354, %s22, 5
          %s356 = scalar_lea.vmem %s5, %s355
        $region52: #{tpu_custom_call.1} parent=43 // pred_fallthru
          _
      $region44: #{tpu_custom_call.1} parent=5 // pred_fallthru
        _
      %p357 = scmp.le.s32.totalorder 1, %s22
      %p358 = scmp.lt.s32.totalorder %s22, 7
      %p359 = pnand %p357, %p358
      %p360 = pneg %p359
      // Predicated region
      $region53: #{tpu_custom_call.1} parent=5 // pred_check
        _
      $region54: #{tpu_custom_call.1} parent=5 // pred_check_branch
        %362 = sbr.rel (%p359) target = $region56
      $region55: #{tpu_custom_call.1} parent=5 // pred_region
        %s363 = ssub.s32 %s22, 1
        // Predicated region
        $region57: #{tpu_custom_call.1} parent=55 // pred_check
          %p364 = pneg %p43
        $region58: #{tpu_custom_call.1} parent=55 // pred_check_branch
          %366 = sbr.rel (%p364) target = $region60
        $region59: #{tpu_custom_call.1} parent=55 // pred_region
          %367 = dma.done [#allocation7], 1024
        $region60: #{tpu_custom_call.1} parent=55 // pred_fallthru
          _
        // Predicated region
        $region61: #{tpu_custom_call.1} parent=55 // pred_check
          %p368 = pneg %p64
        $region62: #{tpu_custom_call.1} parent=55 // pred_check_branch
          %370 = sbr.rel (%p368) target = $region64
        $region63: #{tpu_custom_call.1} parent=55 // pred_region
          %371 = dma.done [#allocation11], 1024
        $region64: #{tpu_custom_call.1} parent=55 // pred_fallthru
          _
        // Predicated region
        $region65: #{tpu_custom_call.1} parent=55 // pred_check
          %p372 = pneg %p85
        $region66: #{tpu_custom_call.1} parent=55 // pred_check_branch
          %374 = sbr.rel (%p372) target = $region68
        $region67: #{tpu_custom_call.1} parent=55 // pred_region
          %375 = dma.done [#allocation11], 1024
        $region68: #{tpu_custom_call.1} parent=55 // pred_fallthru
          _
        %s376 = sand.u32 %s27, 1
        %s377 = scalar_lea.sflag [#allocation14], %s376
        %s378 = sand.u32 %s119, 1
        %s379 = smul.addr %s378, 128
        %s380 = scalar_lea.vmem [#allocation13], %s379
        // Predicated region
        $region69: #{tpu_custom_call.1} parent=55 // pred_check
          %p381 = pneg %p132
        $region70: #{tpu_custom_call.1} parent=55 // pred_check_branch
          %383 = sbr.rel (%p381) target = $region72
        $region71: #{tpu_custom_call.1} parent=55 // pred_region
          %384 = dma.done %s377, 2048
        $region72: #{tpu_custom_call.1} parent=55 // pred_fallthru
          _
        // Predicated region
        $region73: #{tpu_custom_call.1} parent=55 // pred_check
          %p385 = pneg %p179
        $region74: #{tpu_custom_call.1} parent=55 // pred_check_branch
          %387 = sbr.rel (%p385) target = $region76
        $region75: #{tpu_custom_call.1} parent=55 // pred_region
          %388 = dma.done [#allocation14], 1024
        $region76: #{tpu_custom_call.1} parent=55 // pred_fallthru
          _
        // Predicated region
        $region77: #{tpu_custom_call.1} parent=55 // pred_check
          %p389 = pneg %p221
        $region78: #{tpu_custom_call.1} parent=55 // pred_check_branch
          %391 = sbr.rel (%p389) target = $region80
        $region79: #{tpu_custom_call.1} parent=55 // pred_region
          %392 = dma.done [#allocation9], 16
        $region80: #{tpu_custom_call.1} parent=55 // pred_fallthru
          _
        %393 = sfence
        %p394 = pneg %p43
        %p395 = pneg %p40
        %p396 = pneg %p64
        %p397 = pneg %p61
        %p398 = pneg %p85
        %p399 = pneg %p82
        %p400 = pneg %p106
        %p401 = pneg %p103
        %s402 = sand.u32 %s27, 1
        %s403 = scalar_lea.sflag [#allocation14], %s402
        %s404 = sand.u32 %s119, 1
        %s405 = smul.addr %s404, 128
        %s406 = scalar_lea.vmem [#allocation13], %s405
        %p407 = pneg %p132
        %p408 = pneg %p129
        %p409 = scmp.lt.s32.totalorder %s27, 5
        %s410 = scalar_select %p409, %s27, 5
        %s411 = scalar_lea.vmem %s5, %s410
        %p412 = pneg %p158
        %p413 = pneg %p155
        %p414 = pneg %p179
        %p415 = pneg %p176
        %p416 = pneg %p200
        %p417 = pneg %p197
        %p418 = pneg %p221
        %p419 = pneg %p218
        %p420 = pneg %p242
        %p421 = pneg %p239
        %p422 = scmp.lt.s32.totalorder %s27, 5
        %s423 = scalar_select %p422, %s27, 5
        %s424 = scalar_lea.vmem %s5, %s423
        %p426 = scmp.eq.s32.totalorder %s27, 0
        // Predicated region
        $region81: #{tpu_custom_call.1} parent=55 // pred_check
          %p427 = pneg %p426
        $region82: #{tpu_custom_call.1} parent=55 // pred_check_branch
          %429 = sbr.rel (%p427) target = $region84
        $region83: #{tpu_custom_call.1} parent=55 // pred_region
          %v430 = vld [vmem:[#allocation6] sm:$0xf]
          %v431 = vld [vmem:[#allocation6 + $0x4] sm:$0xf]
          %v432 = vld [vmem:[#allocation6 + $0x8] sm:$0xf]
          %v433 = vld [vmem:[#allocation6 + $0xc] sm:$0xf]
          %v434 = vld [vmem:[#allocation6 + $0x10] sm:$0xf]
          %v435 = vld [vmem:[#allocation6 + $0x14] sm:$0xf]
          %v436 = vld [vmem:[#allocation6 + $0x18] sm:$0xf]
          %v437 = vld [vmem:[#allocation6 + $0x1c] sm:$0xf]
          %v438 = vld [vmem:[#allocation6 + $0x20] sm:$0xf]
          %v439 = vld [vmem:[#allocation6 + $0x24] sm:$0xf]
          %v440 = vld [vmem:[#allocation6 + $0x28] sm:$0xf]
          %v441 = vld [vmem:[#allocation6 + $0x2c] sm:$0xf]
          %v442 = vld [vmem:[#allocation6 + $0x30] sm:$0xf]
          %v443 = vld [vmem:[#allocation6 + $0x34] sm:$0xf]
          %v444 = vld [vmem:[#allocation6 + $0x38] sm:$0xf]
          %v445 = vld [vmem:[#allocation6 + $0x3c] sm:$0xf]
          %v446 = vld [vmem:[#allocation12] sm:$0xf]
          %v447 = vld [vmem:[#allocation12 + $0x4] sm:$0xf]
          %v448 = vld [vmem:[#allocation12 + $0x8] sm:$0xf]
          %v449 = vld [vmem:[#allocation12 + $0xc] sm:$0xf]
          %v450 = vld [vmem:[#allocation12 + $0x10] sm:$0xf]
          %v451 = vld [vmem:[#allocation12 + $0x14] sm:$0xf]
          %v452 = vld [vmem:[#allocation12 + $0x18] sm:$0xf]
          %v453 = vld [vmem:[#allocation12 + $0x1c] sm:$0xf]
          %v454 = vld [vmem:[#allocation12 + $0x20] sm:$0xf]
          %v455 = vld [vmem:[#allocation12 + $0x24] sm:$0xf]
          %v456 = vld [vmem:[#allocation12 + $0x28] sm:$0xf]
          %v457 = vld [vmem:[#allocation12 + $0x2c] sm:$0xf]
          %v458 = vld [vmem:[#allocation12 + $0x30] sm:$0xf]
          %v459 = vld [vmem:[#allocation12 + $0x34] sm:$0xf]
          %v460 = vld [vmem:[#allocation12 + $0x38] sm:$0xf]
          %v461 = vld [vmem:[#allocation12 + $0x3c] sm:$0xf]
          %v462 = vld [vmem:[%s3] sm:$0x1]
          %v464 = vlaneseq
          %v465 = vshrl.u32 %v464, 7
          %v466 = vsub.s32 0, %v465
          %v467 = vrot.slane %v462, %v466
          %v485 = vunpack.c.l.b16 %v430
          %v486 = vunpack.c.l.b16 %v431
          %v487 = vunpack.c.l.b16 %v432
          %v488 = vunpack.c.l.b16 %v433
          %v489 = vunpack.c.l.b16 %v434
          %v490 = vunpack.c.l.b16 %v435
          %v491 = vunpack.c.l.b16 %v436
          %v492 = vunpack.c.l.b16 %v437
          %v493 = vunpack.c.l.b16 %v438
          %v494 = vunpack.c.l.b16 %v439
          %v495 = vunpack.c.l.b16 %v440
          %v496 = vunpack.c.l.b16 %v441
          %v497 = vunpack.c.l.b16 %v442
          %v498 = vunpack.c.l.b16 %v443
          %v499 = vunpack.c.l.b16 %v444
          %v500 = vunpack.c.l.b16 %v445
          %v501 = vpack.c.b16 %v486, %v485
          %v502 = vpack.c.b16 %v488, %v487
          %v503 = vpack.c.b16 %v490, %v489
          %v504 = vpack.c.b16 %v492, %v491
          %v505 = vpack.c.b16 %v494, %v493
          %v506 = vpack.c.b16 %v496, %v495
          %v507 = vpack.c.b16 %v498, %v497
          %v508 = vpack.c.b16 %v500, %v499
          %v533 = vunpack.c.l.b16 %v446
          %v534 = vunpack.c.l.b16 %v447
          %v535 = vunpack.c.l.b16 %v448
          %v536 = vunpack.c.l.b16 %v449
          %v537 = vunpack.c.l.b16 %v450
          %v538 = vunpack.c.l.b16 %v451
          %v539 = vunpack.c.l.b16 %v452
          %v540 = vunpack.c.l.b16 %v453
          %v541 = vunpack.c.l.b16 %v454
          %v542 = vunpack.c.l.b16 %v455
          %v543 = vunpack.c.l.b16 %v456
          %v544 = vunpack.c.l.b16 %v457
          %v545 = vunpack.c.l.b16 %v458
          %v546 = vunpack.c.l.b16 %v459
          %v547 = vunpack.c.l.b16 %v460
          %v548 = vunpack.c.l.b16 %v461
          %v549 = vpack.c.b16 %v534, %v533
          %v550 = vpack.c.b16 %v536, %v535
          %v551 = vpack.c.b16 %v538, %v537
          %v552 = vpack.c.b16 %v540, %v539
          %v553 = vpack.c.b16 %v542, %v541
          %v554 = vpack.c.b16 %v544, %v543
          %v555 = vpack.c.b16 %v546, %v545
          %v556 = vpack.c.b16 %v548, %v547
          %565 = vmatprep.subr.bf16.mxu0 0
          %566 = vmatpush1.bf16.msra.mxu0 %v549
          %567 = vmatprep.subr.bf16.mxu0 0
          %568 = vmatpush1.bf16.msra.mxu0 %v550
          %569 = vmatprep.subr.bf16.mxu0 0
          %570 = vmatpush1.bf16.msra.mxu0 %v551
          %571 = vmatprep.subr.bf16.mxu0 0
          %572 = vmatpush1.bf16.msra.mxu0 %v552
          %573 = vmatprep.subr.bf16.mxu0 0
          %574 = vmatpush1.bf16.msra.mxu0 %v553
          %575 = vmatprep.subr.bf16.mxu0 0
          %576 = vmatpush1.bf16.msra.mxu0 %v554
          %577 = vmatprep.subr.bf16.mxu0 0
          %578 = vmatpush1.bf16.msra.mxu0 %v555
          %579 = vmatprep.subr.bf16.mxu0 0
          %580 = vmatpush1.bf16.msra.mxu0 %v556
          %581 = vmatprep.subr.bf16.mxu0 0
          %582 = vmatpush1.bf16.msra.mxu0 0
          %583 = vmatprep.subr.bf16.mxu0 0
          %584 = vmatpush1.bf16.msra.mxu0 0
          %585 = vmatprep.subr.bf16.mxu0 0
          %586 = vmatpush1.bf16.msra.mxu0 0
          %587 = vmatprep.subr.bf16.mxu0 0
          %588 = vmatpush1.bf16.msra.mxu0 0
          %589 = vmatprep.subr.bf16.mxu0 0
          %590 = vmatpush1.bf16.msra.mxu0 0
          %591 = vmatprep.subr.bf16.mxu0 0
          %592 = vmatpush1.bf16.msra.mxu0 0
          %593 = vmatprep.subr.bf16.mxu0 0
          %594 = vmatpush1.bf16.msra.mxu0 0
          %595 = vmatprep.subr.bf16.mxu0 0
          %596 = vmatpush1.bf16.msra.mxu0 0
          %597 = vmatprep.mubr.bf16.mxu0 0
          %598 = vmatmul.mubr.bf16.gmra.mrb[0].mxu0 %v501
          %v599 = vpop.f32.mrb[0].mxu0
          %v600 = vadd.f32 %v467, %v599
          %v601 = vpop.f32.mrb[0].mxu0
          %v602 = vpop.f32.mrb[0].mxu0
          %v603 = vadd.f32 %v467, %v602
          %v604 = vpop.f32.mrb[0].mxu0
          %605 = vmatprep.mubr.bf16.mxu0 0
          %606 = vmatmul.mubr.bf16.gmra.mrb[0].mxu0 %v502
          %v607 = vpop.f32.mrb[0].mxu0
          %v608 = vadd.f32 %v467, %v607
          %v609 = vpop.f32.mrb[0].mxu0
          %v610 = vpop.f32.mrb[0].mxu0
          %v611 = vadd.f32 %v467, %v610
          %v612 = vpop.f32.mrb[0].mxu0
          %613 = vmatprep.mubr.bf16.mxu0 0
          %614 = vmatmul.mubr.bf16.gmra.mrb[0].mxu0 %v503
          %v615 = vpop.f32.mrb[0].mxu0
          %v616 = vadd.f32 %v467, %v615
          %v617 = vpop.f32.mrb[0].mxu0
          %v618 = vpop.f32.mrb[0].mxu0
          %v619 = vadd.f32 %v467, %v618
          %v620 = vpop.f32.mrb[0].mxu0
          %621 = vmatprep.mubr.bf16.mxu0 0
          %622 = vmatmul.mubr.bf16.gmra.mrb[0].mxu0 %v504
          %v623 = vpop.f32.mrb[0].mxu0
          %v624 = vadd.f32 %v467, %v623
          %v625 = vpop.f32.mrb[0].mxu0
          %v626 = vpop.f32.mrb[0].mxu0
          %v627 = vadd.f32 %v467, %v626
          %v628 = vpop.f32.mrb[0].mxu0
          %629 = vmatprep.mubr.bf16.mxu0 0
          %630 = vmatmul.mubr.bf16.gmra.mrb[0].mxu0 %v505
          %v631 = vpop.f32.mrb[0].mxu0
          %v632 = vadd.f32 %v467, %v631
          %v633 = vpop.f32.mrb[0].mxu0
          %v634 = vpop.f32.mrb[0].mxu0
          %v635 = vadd.f32 %v467, %v634
          %v636 = vpop.f32.mrb[0].mxu0
          %637 = vmatprep.mubr.bf16.mxu0 0
          %638 = vmatmul.mubr.bf16.gmra.mrb[0].mxu0 %v506
          %v639 = vpop.f32.mrb[0].mxu0
          %v640 = vadd.f32 %v467, %v639
          %v641 = vpop.f32.mrb[0].mxu0
          %v642 = vpop.f32.mrb[0].mxu0
          %v643 = vadd.f32 %v467, %v642
          %v644 = vpop.f32.mrb[0].mxu0
          %645 = vmatprep.mubr.bf16.mxu0 0
          %646 = vmatmul.mubr.bf16.gmra.mrb[0].mxu0 %v507
          %v647 = vpop.f32.mrb[0].mxu0
          %v648 = vadd.f32 %v467, %v647
          %v649 = vpop.f32.mrb[0].mxu0
          %v650 = vpop.f32.mrb[0].mxu0
          %v651 = vadd.f32 %v467, %v650
          %v652 = vpop.f32.mrb[0].mxu0
          %653 = vmatprep.mubr.bf16.mxu0 0
          %654 = vmatmul.mubr.bf16.gmra.mrb[0].mxu0 %v508
          %v655 = vpop.f32.mrb[0].mxu0
          %v656 = vadd.f32 %v467, %v655
          %v657 = vpop.f32.mrb[0].mxu0
          %v658 = vpop.f32.mrb[0].mxu0
          %v659 = vadd.f32 %v467, %v658
          %v660 = vpop.f32.mrb[0].mxu0
          %661 = vdwg.mxu0
          %662 = vst [vmem:[#allocation2] sm:$0xff] %v600
          %663 = vst [vmem:[#allocation2 + $0x8] sm:$0xff] %v603
          %664 = vst [vmem:[#allocation2 + $0x10] sm:$0xff] %v608
          %665 = vst [vmem:[#allocation2 + $0x18] sm:$0xff] %v611
          %666 = vst [vmem:[#allocation2 + $0x20] sm:$0xff] %v616
          %667 = vst [vmem:[#allocation2 + $0x28] sm:$0xff] %v619
          %668 = vst [vmem:[#allocation2 + $0x30] sm:$0xff] %v624
          %669 = vst [vmem:[#allocation2 + $0x38] sm:$0xff] %v627
          %670 = vst [vmem:[#allocation2 + $0x40] sm:$0xff] %v632
          %671 = vst [vmem:[#allocation2 + $0x48] sm:$0xff] %v635
          %672 = vst [vmem:[#allocation2 + $0x50] sm:$0xff] %v640
          %673 = vst [vmem:[#allocation2 + $0x58] sm:$0xff] %v643
          %674 = vst [vmem:[#allocation2 + $0x60] sm:$0xff] %v648
          %675 = vst [vmem:[#allocation2 + $0x68] sm:$0xff] %v651
          %676 = vst [vmem:[#allocation2 + $0x70] sm:$0xff] %v656
          %677 = vst [vmem:[#allocation2 + $0x78] sm:$0xff] %v659
          %v678 = vmul.f32 %v600, 0.2
          %v679 = vmul.f32 %v603, 0.2
          %v680 = vmul.f32 %v608, 0.2
          %v681 = vmul.f32 %v611, 0.2
          %v682 = vmul.f32 %v616, 0.2
          %v683 = vmul.f32 %v619, 0.2
          %v684 = vmul.f32 %v624, 0.2
          %v685 = vmul.f32 %v627, 0.2
          %v686 = vmul.f32 %v632, 0.2
          %v687 = vmul.f32 %v635, 0.2
          %v688 = vmul.f32 %v640, 0.2
          %v689 = vmul.f32 %v643, 0.2
          %v690 = vmul.f32 %v648, 0.2
          %v691 = vmul.f32 %v651, 0.2
          %v692 = vmul.f32 %v656, 0.2
          %v693 = vmul.f32 %v659, 0.2
          %694 = vst [vmem:[#allocation3] sm:$0xff] %v678
          %695 = vst [vmem:[#allocation3 + $0x8] sm:$0xff] %v679
          %696 = vst [vmem:[#allocation3 + $0x10] sm:$0xff] %v680
          %697 = vst [vmem:[#allocation3 + $0x18] sm:$0xff] %v681
          %698 = vst [vmem:[#allocation3 + $0x20] sm:$0xff] %v682
          %699 = vst [vmem:[#allocation3 + $0x28] sm:$0xff] %v683
          %700 = vst [vmem:[#allocation3 + $0x30] sm:$0xff] %v684
          %701 = vst [vmem:[#allocation3 + $0x38] sm:$0xff] %v685
          %702 = vst [vmem:[#allocation3 + $0x40] sm:$0xff] %v686
          %703 = vst [vmem:[#allocation3 + $0x48] sm:$0xff] %v687
          %704 = vst [vmem:[#allocation3 + $0x50] sm:$0xff] %v688
          %705 = vst [vmem:[#allocation3 + $0x58] sm:$0xff] %v689
          %706 = vst [vmem:[#allocation3 + $0x60] sm:$0xff] %v690
          %707 = vst [vmem:[#allocation3 + $0x68] sm:$0xff] %v691
          %708 = vst [vmem:[#allocation3 + $0x70] sm:$0xff] %v692
          %709 = vst [vmem:[#allocation3 + $0x78] sm:$0xff] %v693
          %710 = vst [vmem:[#allocation4] sm:$0xff] 0.0
          %711 = vst [vmem:[#allocation4 + $0x8] sm:$0xff] 0.0
          %712 = vst [vmem:[#allocation4 + $0x10] sm:$0xff] 0.0
          %713 = vst [vmem:[#allocation4 + $0x18] sm:$0xff] 0.0
          %714 = vst [vmem:[#allocation4 + $0x20] sm:$0xff] 0.0
          %715 = vst [vmem:[#allocation4 + $0x28] sm:$0xff] 0.0
          %716 = vst [vmem:[#allocation4 + $0x30] sm:$0xff] 0.0
          %717 = vst [vmem:[#allocation4 + $0x38] sm:$0xff] 0.0
          %718 = vst [vmem:[#allocation4 + $0x40] sm:$0xff] 0.0
          %719 = vst [vmem:[#allocation4 + $0x48] sm:$0xff] 0.0
          %720 = vst [vmem:[#allocation4 + $0x50] sm:$0xff] 0.0
          %721 = vst [vmem:[#allocation4 + $0x58] sm:$0xff] 0.0
          %722 = vst [vmem:[#allocation4 + $0x60] sm:$0xff] 0.0
          %723 = vst [vmem:[#allocation4 + $0x68] sm:$0xff] 0.0
          %724 = vst [vmem:[#allocation4 + $0x70] sm:$0xff] 0.0
          %725 = vst [vmem:[#allocation4 + $0x78] sm:$0xff] 0.0
        $region84: #{tpu_custom_call.1} parent=55 // pred_fallthru
          _
        %v726 = vld [vmem:[#allocation2] sm:$0xff]
        %v727 = vld [vmem:[#allocation2 + $0x8] sm:$0xff]
        %v728 = vld [vmem:[#allocation2 + $0x10] sm:$0xff]
        %v729 = vld [vmem:[#allocation2 + $0x18] sm:$0xff]
        %v730 = vld [vmem:[#allocation2 + $0x20] sm:$0xff]
        %v731 = vld [vmem:[#allocation2 + $0x28] sm:$0xff]
        %v732 = vld [vmem:[#allocation2 + $0x30] sm:$0xff]
        %v733 = vld [vmem:[#allocation2 + $0x38] sm:$0xff]
        %v734 = vld [vmem:[#allocation2 + $0x40] sm:$0xff]
        %v735 = vld [vmem:[#allocation2 + $0x48] sm:$0xff]
        %v736 = vld [vmem:[#allocation2 + $0x50] sm:$0xff]
        %v737 = vld [vmem:[#allocation2 + $0x58] sm:$0xff]
        %v738 = vld [vmem:[#allocation2 + $0x60] sm:$0xff]
        %v739 = vld [vmem:[#allocation2 + $0x68] sm:$0xff]
        %v740 = vld [vmem:[#allocation2 + $0x70] sm:$0xff]
        %v741 = vld [vmem:[#allocation2 + $0x78] sm:$0xff]
        %v742 = vpack.c.bf16 %v727, %v726
        %v743 = vpack.c.bf16 %v729, %v728
        %v744 = vpack.c.bf16 %v731, %v730
        %v745 = vpack.c.bf16 %v733, %v732
        %v746 = vpack.c.bf16 %v735, %v734
        %v747 = vpack.c.bf16 %v737, %v736
        %v748 = vpack.c.bf16 %v739, %v738
        %v749 = vpack.c.bf16 %v741, %v740
        %v750 = vld [vmem:[#allocation10] sm:$0xf]
        %v751 = vld [vmem:[#allocation10 + $0x4] sm:$0xf]
        %v752 = vld [vmem:[#allocation10 + $0x8] sm:$0xf]
        %v753 = vld [vmem:[#allocation10 + $0xc] sm:$0xf]
        %v754 = vld [vmem:[#allocation10 + $0x10] sm:$0xf]
        %v755 = vld [vmem:[#allocation10 + $0x14] sm:$0xf]
        %v756 = vld [vmem:[#allocation10 + $0x18] sm:$0xf]
        %v757 = vld [vmem:[#allocation10 + $0x1c] sm:$0xf]
        %v758 = vld [vmem:[#allocation10 + $0x20] sm:$0xf]
        %v759 = vld [vmem:[#allocation10 + $0x24] sm:$0xf]
        %v760 = vld [vmem:[#allocation10 + $0x28] sm:$0xf]
        %v761 = vld [vmem:[#allocation10 + $0x2c] sm:$0xf]
        %v762 = vld [vmem:[#allocation10 + $0x30] sm:$0xf]
        %v763 = vld [vmem:[#allocation10 + $0x34] sm:$0xf]
        %v764 = vld [vmem:[#allocation10 + $0x38] sm:$0xf]
        %v765 = vld [vmem:[#allocation10 + $0x3c] sm:$0xf]
        %v782 = vunpack.c.l.b16 %v750
        %v783 = vunpack.c.l.b16 %v751
        %v784 = vunpack.c.l.b16 %v752
        %v785 = vunpack.c.l.b16 %v753
        %v786 = vunpack.c.l.b16 %v754
        %v787 = vunpack.c.l.b16 %v755
        %v788 = vunpack.c.l.b16 %v756
        %v789 = vunpack.c.l.b16 %v757
        %v790 = vunpack.c.l.b16 %v758
        %v791 = vunpack.c.l.b16 %v759
        %v792 = vunpack.c.l.b16 %v760
        %v793 = vunpack.c.l.b16 %v761
        %v794 = vunpack.c.l.b16 %v762
        %v795 = vunpack.c.l.b16 %v763
        %v796 = vunpack.c.l.b16 %v764
        %v797 = vunpack.c.l.b16 %v765
        %v798 = vpack.c.b16 %v783, %v782
        %v799 = vpack.c.b16 %v785, %v784
        %v800 = vpack.c.b16 %v787, %v786
        %v801 = vpack.c.b16 %v789, %v788
        %v802 = vpack.c.b16 %v791, %v790
        %v803 = vpack.c.b16 %v793, %v792
        %v804 = vpack.c.b16 %v795, %v794
        %v805 = vpack.c.b16 %v797, %v796
        %814 = vmatprep.subr.bf16.mxu0 0
        %815 = vmatpush1.bf16.msra.mxu0 %v742
        %816 = vmatprep.subr.bf16.mxu0 0
        %817 = vmatpush1.bf16.msra.mxu0 %v743
        %818 = vmatprep.subr.bf16.mxu0 0
        %819 = vmatpush1.bf16.msra.mxu0 %v744
        %820 = vmatprep.subr.bf16.mxu0 0
        %821 = vmatpush1.bf16.msra.mxu0 %v745
        %822 = vmatprep.subr.bf16.mxu0 0
        %823 = vmatpush1.bf16.msra.mxu0 %v746
        %824 = vmatprep.subr.bf16.mxu0 0
        %825 = vmatpush1.bf16.msra.mxu0 %v747
        %826 = vmatprep.subr.bf16.mxu0 0
        %827 = vmatpush1.bf16.msra.mxu0 %v748
        %828 = vmatprep.subr.bf16.mxu0 0
        %829 = vmatpush1.bf16.msra.mxu0 %v749
        %830 = vmatprep.subr.bf16.mxu0 0
        %831 = vmatpush1.bf16.msra.mxu0 0
        %832 = vmatprep.subr.bf16.mxu0 0
        %833 = vmatpush1.bf16.msra.mxu0 0
        %834 = vmatprep.subr.bf16.mxu0 0
        %835 = vmatpush1.bf16.msra.mxu0 0
        %836 = vmatprep.subr.bf16.mxu0 0
        %837 = vmatpush1.bf16.msra.mxu0 0
        %838 = vmatprep.subr.bf16.mxu0 0
        %839 = vmatpush1.bf16.msra.mxu0 0
        %840 = vmatprep.subr.bf16.mxu0 0
        %841 = vmatpush1.bf16.msra.mxu0 0
        %842 = vmatprep.subr.bf16.mxu0 0
        %843 = vmatpush1.bf16.msra.mxu0 0
        %844 = vmatprep.subr.bf16.mxu0 0
        %845 = vmatpush1.bf16.msra.mxu0 0
        %846 = vmatprep.mubr.bf16.mxu0 0
        %847 = vmatmul.mubr.bf16.gmra.mrb[0].mxu0 %v798
        %v848 = vpop.f32.mrb[0].mxu0
        %v849 = vadd.f32 0.0, %v848
        %v850 = vpop.f32.mrb[0].mxu0
        %v851 = vpop.f32.mrb[0].mxu0
        %v852 = vadd.f32 0.0, %v851
        %v853 = vpop.f32.mrb[0].mxu0
        %854 = vmatprep.mubr.bf16.mxu0 0
        %855 = vmatmul.mubr.bf16.gmra.mrb[0].mxu0 %v799
        %v856 = vpop.f32.mrb[0].mxu0
        %v857 = vadd.f32 0.0, %v856
        %v858 = vpop.f32.mrb[0].mxu0
        %v859 = vpop.f32.mrb[0].mxu0
        %v860 = vadd.f32 0.0, %v859
        %v861 = vpop.f32.mrb[0].mxu0
        %862 = vmatprep.mubr.bf16.mxu0 0
        %863 = vmatmul.mubr.bf16.gmra.mrb[0].mxu0 %v800
        %v864 = vpop.f32.mrb[0].mxu0
        %v865 = vadd.f32 0.0, %v864
        %v866 = vpop.f32.mrb[0].mxu0
        %v867 = vpop.f32.mrb[0].mxu0
        %v868 = vadd.f32 0.0, %v867
        %v869 = vpop.f32.mrb[0].mxu0
        %870 = vmatprep.mubr.bf16.mxu0 0
        %871 = vmatmul.mubr.bf16.gmra.mrb[0].mxu0 %v801
        %v872 = vpop.f32.mrb[0].mxu0
        %v873 = vadd.f32 0.0, %v872
        %v874 = vpop.f32.mrb[0].mxu0
        %v875 = vpop.f32.mrb[0].mxu0
        %v876 = vadd.f32 0.0, %v875
        %v877 = vpop.f32.mrb[0].mxu0
        %878 = vmatprep.mubr.bf16.mxu0 0
        %879 = vmatmul.mubr.bf16.gmra.mrb[0].mxu0 %v802
        %v880 = vpop.f32.mrb[0].mxu0
        %v881 = vadd.f32 0.0, %v880
        %v882 = vpop.f32.mrb[0].mxu0
        %v883 = vpop.f32.mrb[0].mxu0
        %v884 = vadd.f32 0.0, %v883
        %v885 = vpop.f32.mrb[0].mxu0
        %886 = vmatprep.mubr.bf16.mxu0 0
        %887 = vmatmul.mubr.bf16.gmra.mrb[0].mxu0 %v803
        %v888 = vpop.f32.mrb[0].mxu0
        %v889 = vadd.f32 0.0, %v888
        %v890 = vpop.f32.mrb[0].mxu0
        %v891 = vpop.f32.mrb[0].mxu0
        %v892 = vadd.f32 0.0, %v891
        %v893 = vpop.f32.mrb[0].mxu0
        %894 = vmatprep.mubr.bf16.mxu0 0
        %895 = vmatmul.mubr.bf16.gmra.mrb[0].mxu0 %v804
        %v896 = vpop.f32.mrb[0].mxu0
        %v897 = vadd.f32 0.0, %v896
        %v898 = vpop.f32.mrb[0].mxu0
        %v899 = vpop.f32.mrb[0].mxu0
        %v900 = vadd.f32 0.0, %v899
        %v901 = vpop.f32.mrb[0].mxu0
        %902 = vmatprep.mubr.bf16.mxu0 0
        %903 = vmatmul.mubr.bf16.gmra.mrb[0].mxu0 %v805
        %v904 = vpop.f32.mrb[0].mxu0
        %v905 = vadd.f32 0.0, %v904
        %v906 = vpop.f32.mrb[0].mxu0
        %v907 = vpop.f32.mrb[0].mxu0
        %v908 = vadd.f32 0.0, %v907
        %v909 = vpop.f32.mrb[0].mxu0
        %910 = vdwg.mxu0
        %v911 = vpack.c.bf16 %v852, %v849
        %v912 = vpack.c.bf16 %v860, %v857
        %v913 = vpack.c.bf16 %v868, %v865
        %v914 = vpack.c.bf16 %v876, %v873
        %v915 = vpack.c.bf16 %v884, %v881
        %v916 = vpack.c.bf16 %v892, %v889
        %v917 = vpack.c.bf16 %v900, %v897
        %v918 = vpack.c.bf16 %v908, %v905
        %919 = vst [vmem:[#allocation5] sm:$0xff] %v911
        %920 = vst [vmem:[#allocation5 + $0x10] sm:$0xff] %v912
        %921 = vst [vmem:[#allocation5 + $0x20] sm:$0xff] %v913
        %922 = vst [vmem:[#allocation5 + $0x30] sm:$0xff] %v914
        %923 = vst [vmem:[#allocation5 + $0x40] sm:$0xff] %v915
        %924 = vst [vmem:[#allocation5 + $0x50] sm:$0xff] %v916
        %925 = vst [vmem:[#allocation5 + $0x60] sm:$0xff] %v917
        %926 = vst [vmem:[#allocation5 + $0x70] sm:$0xff] %v918
        %927 = vst [vmem:[#allocation5 + $0x8] sm:$0xff] %v742
        %928 = vst [vmem:[#allocation5 + $0x18] sm:$0xff] %v743
        %929 = vst [vmem:[#allocation5 + $0x28] sm:$0xff] %v744
        %930 = vst [vmem:[#allocation5 + $0x38] sm:$0xff] %v745
        %931 = vst [vmem:[#allocation5 + $0x48] sm:$0xff] %v746
        %932 = vst [vmem:[#allocation5 + $0x58] sm:$0xff] %v747
        %933 = vst [vmem:[#allocation5 + $0x68] sm:$0xff] %v748
        %934 = vst [vmem:[#allocation5 + $0x78] sm:$0xff] %v749
        %v935 = vld [vmem:[#allocation5] sm:$0xff]
        %v936 = vld [vmem:[#allocation5 + $0x8] sm:$0xff]
        %v937 = vld [vmem:[#allocation5 + $0x10] sm:$0xff]
        %v938 = vld [vmem:[#allocation5 + $0x18] sm:$0xff]
        %v939 = vld [vmem:[#allocation5 + $0x20] sm:$0xff]
        %v940 = vld [vmem:[#allocation5 + $0x28] sm:$0xff]
        %v941 = vld [vmem:[#allocation5 + $0x30] sm:$0xff]
        %v942 = vld [vmem:[#allocation5 + $0x38] sm:$0xff]
        %v943 = vld [vmem:[#allocation5 + $0x40] sm:$0xff]
        %v944 = vld [vmem:[#allocation5 + $0x48] sm:$0xff]
        %v945 = vld [vmem:[#allocation5 + $0x50] sm:$0xff]
        %v946 = vld [vmem:[#allocation5 + $0x58] sm:$0xff]
        %v947 = vld [vmem:[#allocation5 + $0x60] sm:$0xff]
        %v948 = vld [vmem:[#allocation5 + $0x68] sm:$0xff]
        %v949 = vld [vmem:[#allocation5 + $0x70] sm:$0xff]
        %v950 = vld [vmem:[#allocation5 + $0x78] sm:$0xff]
        %v951 = vld [vmem:[%s380] sm:$0xf]
        %v952 = vld [vmem:[%s380 + $0x4] sm:$0xf]
        %v953 = vld [vmem:[%s380 + $0x8] sm:$0xf]
        %v954 = vld [vmem:[%s380 + $0xc] sm:$0xf]
        %v955 = vld [vmem:[%s380 + $0x10] sm:$0xf]
        %v956 = vld [vmem:[%s380 + $0x14] sm:$0xf]
        %v957 = vld [vmem:[%s380 + $0x18] sm:$0xf]
        %v958 = vld [vmem:[%s380 + $0x1c] sm:$0xf]
        %v959 = vld [vmem:[%s380 + $0x20] sm:$0xf]
        %v960 = vld [vmem:[%s380 + $0x24] sm:$0xf]
        %v961 = vld [vmem:[%s380 + $0x28] sm:$0xf]
        %v962 = vld [vmem:[%s380 + $0x2c] sm:$0xf]
        %v963 = vld [vmem:[%s380 + $0x30] sm:$0xf]
        %v964 = vld [vmem:[%s380 + $0x34] sm:$0xf]
        %v965 = vld [vmem:[%s380 + $0x38] sm:$0xf]
        %v966 = vld [vmem:[%s380 + $0x3c] sm:$0xf]
        %v967 = vld [vmem:[%s380 + $0x40] sm:$0xf]
        %v968 = vld [vmem:[%s380 + $0x44] sm:$0xf]
        %v969 = vld [vmem:[%s380 + $0x48] sm:$0xf]
        %v970 = vld [vmem:[%s380 + $0x4c] sm:$0xf]
        %v971 = vld [vmem:[%s380 + $0x50] sm:$0xf]
        %v972 = vld [vmem:[%s380 + $0x54] sm:$0xf]
        %v973 = vld [vmem:[%s380 + $0x58] sm:$0xf]
        %v974 = vld [vmem:[%s380 + $0x5c] sm:$0xf]
        %v975 = vld [vmem:[%s380 + $0x60] sm:$0xf]
        %v976 = vld [vmem:[%s380 + $0x64] sm:$0xf]
        %v977 = vld [vmem:[%s380 + $0x68] sm:$0xf]
        %v978 = vld [vmem:[%s380 + $0x6c] sm:$0xf]
        %v979 = vld [vmem:[%s380 + $0x70] sm:$0xf]
        %v980 = vld [vmem:[%s380 + $0x74] sm:$0xf]
        %v981 = vld [vmem:[%s380 + $0x78] sm:$0xf]
        %v982 = vld [vmem:[%s380 + $0x7c] sm:$0xf]
        %v983 = vld [vmem:[%s424] sm:$0x1]
        %v985 = vlaneseq
        %v986 = vshrl.u32 %v985, 7
        %v987 = vsub.s32 0, %v986
        %v988 = vrot.slane %v983, %v987
        %v1022 = vunpack.c.l.b16 %v951
        %v1023 = vunpack.c.l.b16 %v952
        %v1024 = vunpack.c.l.b16 %v953
        %v1025 = vunpack.c.l.b16 %v954
        %v1026 = vunpack.c.l.b16 %v955
        %v1027 = vunpack.c.l.b16 %v956
        %v1028 = vunpack.c.l.b16 %v957
        %v1029 = vunpack.c.l.b16 %v958
        %v1030 = vunpack.c.l.b16 %v959
        %v1031 = vunpack.c.l.b16 %v960
        %v1032 = vunpack.c.l.b16 %v961
        %v1033 = vunpack.c.l.b16 %v962
        %v1034 = vunpack.c.l.b16 %v963
        %v1035 = vunpack.c.l.b16 %v964
        %v1036 = vunpack.c.l.b16 %v965
        %v1037 = vunpack.c.l.b16 %v966
        %v1038 = vunpack.c.l.b16 %v967
        %v1039 = vunpack.c.l.b16 %v968
        %v1040 = vunpack.c.l.b16 %v969
        %v1041 = vunpack.c.l.b16 %v970
        %v1042 = vunpack.c.l.b16 %v971
        %v1043 = vunpack.c.l.b16 %v972
        %v1044 = vunpack.c.l.b16 %v973
        %v1045 = vunpack.c.l.b16 %v974
        %v1046 = vunpack.c.l.b16 %v975
        %v1047 = vunpack.c.l.b16 %v976
        %v1048 = vunpack.c.l.b16 %v977
        %v1049 = vunpack.c.l.b16 %v978
        %v1050 = vunpack.c.l.b16 %v979
        %v1051 = vunpack.c.l.b16 %v980
        %v1052 = vunpack.c.l.b16 %v981
        %v1053 = vunpack.c.l.b16 %v982
        %v1054 = vpack.c.b16 %v1023, %v1022
        %v1055 = vpack.c.b16 %v1025, %v1024
        %v1056 = vpack.c.b16 %v1027, %v1026
        %v1057 = vpack.c.b16 %v1029, %v1028
        %v1058 = vpack.c.b16 %v1031, %v1030
        %v1059 = vpack.c.b16 %v1033, %v1032
        %v1060 = vpack.c.b16 %v1035, %v1034
        %v1061 = vpack.c.b16 %v1037, %v1036
        %v1062 = vpack.c.b16 %v1039, %v1038
        %v1063 = vpack.c.b16 %v1041, %v1040
        %v1064 = vpack.c.b16 %v1043, %v1042
        %v1065 = vpack.c.b16 %v1045, %v1044
        %v1066 = vpack.c.b16 %v1047, %v1046
        %v1067 = vpack.c.b16 %v1049, %v1048
        %v1068 = vpack.c.b16 %v1051, %v1050
        %v1069 = vpack.c.b16 %v1053, %v1052
        %1086 = vmatprep.subr.bf16.mxu0 0
        %1087 = vmatpush1.bf16.msra.mxu0 %v1054
        %1088 = vmatprep.subr.bf16.mxu0 0
        %1089 = vmatpush1.bf16.msra.mxu0 %v1055
        %1090 = vmatprep.subr.bf16.mxu0 0
        %1091 = vmatpush1.bf16.msra.mxu0 %v1056
        %1092 = vmatprep.subr.bf16.mxu0 0
        %1093 = vmatpush1.bf16.msra.mxu0 %v1057
        %1094 = vmatprep.subr.bf16.mxu0 0
        %1095 = vmatpush1.bf16.msra.mxu0 %v1058
        %1096 = vmatprep.subr.bf16.mxu0 0
        %1097 = vmatpush1.bf16.msra.mxu0 %v1059
        %1098 = vmatprep.subr.bf16.mxu0 0
        %1099 = vmatpush1.bf16.msra.mxu0 %v1060
        %1100 = vmatprep.subr.bf16.mxu0 0
        %1101 = vmatpush1.bf16.msra.mxu0 %v1061
        %1102 = vmatprep.subr.bf16.mxu0 0
        %1103 = vmatpush1.bf16.msra.mxu0 %v1062
        %1104 = vmatprep.subr.bf16.mxu0 0
        %1105 = vmatpush1.bf16.msra.mxu0 %v1063
        %1106 = vmatprep.subr.bf16.mxu0 0
        %1107 = vmatpush1.bf16.msra.mxu0 %v1064
        %1108 = vmatprep.subr.bf16.mxu0 0
        %1109 = vmatpush1.bf16.msra.mxu0 %v1065
        %1110 = vmatprep.subr.bf16.mxu0 0
        %1111 = vmatpush1.bf16.msra.mxu0 %v1066
        %1112 = vmatprep.subr.bf16.mxu0 0
        %1113 = vmatpush1.bf16.msra.mxu0 %v1067
        %1114 = vmatprep.subr.bf16.mxu0 0
        %1115 = vmatpush1.bf16.msra.mxu0 %v1068
        %1116 = vmatprep.subr.bf16.mxu0 0
        %1117 = vmatpush1.bf16.msra.mxu0 %v1069
        %1118 = vmatprep.mubr.bf16.mxu0 %v936
        %1119 = vmatmul.mubr.bf16.gmra.mrb[0].mxu0 %v935
        %v1120 = vpop.f32.mrb[0].mxu0
        %v1121 = vadd.f32 %v988, %v1120
        %v1122 = vpop.f32.mrb[0].mxu0
        %v1123 = vpop.f32.mrb[0].mxu0
        %v1124 = vadd.f32 %v988, %v1123
        %v1125 = vpop.f32.mrb[0].mxu0
        %1126 = vmatprep.mubr.bf16.mxu0 %v938
        %1127 = vmatmul.mubr.bf16.gmra.mrb[0].mxu0 %v937
        %v1128 = vpop.f32.mrb[0].mxu0
        %v1129 = vadd.f32 %v988, %v1128
        %v1130 = vpop.f32.mrb[0].mxu0
        %v1131 = vpop.f32.mrb[0].mxu0
        %v1132 = vadd.f32 %v988, %v1131
        %v1133 = vpop.f32.mrb[0].mxu0
        %1134 = vmatprep.mubr.bf16.mxu0 %v940
        %1135 = vmatmul.mubr.bf16.gmra.mrb[0].mxu0 %v939
        %v1136 = vpop.f32.mrb[0].mxu0
        %v1137 = vadd.f32 %v988, %v1136
        %v1138 = vpop.f32.mrb[0].mxu0
        %v1139 = vpop.f32.mrb[0].mxu0
        %v1140 = vadd.f32 %v988, %v1139
        %v1141 = vpop.f32.mrb[0].mxu0
        %1142 = vmatprep.mubr.bf16.mxu0 %v942
        %1143 = vmatmul.mubr.bf16.gmra.mrb[0].mxu0 %v941
        %v1144 = vpop.f32.mrb[0].mxu0
        %v1145 = vadd.f32 %v988, %v1144
        %v1146 = vpop.f32.mrb[0].mxu0
        %v1147 = vpop.f32.mrb[0].mxu0
        %v1148 = vadd.f32 %v988, %v1147
        %v1149 = vpop.f32.mrb[0].mxu0
        %1150 = vmatprep.mubr.bf16.mxu0 %v944
        %1151 = vmatmul.mubr.bf16.gmra.mrb[0].mxu0 %v943
        %v1152 = vpop.f32.mrb[0].mxu0
        %v1153 = vadd.f32 %v988, %v1152
        %v1154 = vpop.f32.mrb[0].mxu0
        %v1155 = vpop.f32.mrb[0].mxu0
        %v1156 = vadd.f32 %v988, %v1155
        %v1157 = vpop.f32.mrb[0].mxu0
        %1158 = vmatprep.mubr.bf16.mxu0 %v946
        %1159 = vmatmul.mubr.bf16.gmra.mrb[0].mxu0 %v945
        %v1160 = vpop.f32.mrb[0].mxu0
        %v1161 = vadd.f32 %v988, %v1160
        %v1162 = vpop.f32.mrb[0].mxu0
        %v1163 = vpop.f32.mrb[0].mxu0
        %v1164 = vadd.f32 %v988, %v1163
        %v1165 = vpop.f32.mrb[0].mxu0
        %1166 = vmatprep.mubr.bf16.mxu0 %v948
        %1167 = vmatmul.mubr.bf16.gmra.mrb[0].mxu0 %v947
        %v1168 = vpop.f32.mrb[0].mxu0
        %v1169 = vadd.f32 %v988, %v1168
        %v1170 = vpop.f32.mrb[0].mxu0
        %v1171 = vpop.f32.mrb[0].mxu0
        %v1172 = vadd.f32 %v988, %v1171
        %v1173 = vpop.f32.mrb[0].mxu0
        %1174 = vmatprep.mubr.bf16.mxu0 %v950
        %1175 = vmatmul.mubr.bf16.gmra.mrb[0].mxu0 %v949
        %v1176 = vpop.f32.mrb[0].mxu0
        %v1177 = vadd.f32 %v988, %v1176
        %v1178 = vpop.f32.mrb[0].mxu0
        %v1179 = vpop.f32.mrb[0].mxu0
        %v1180 = vadd.f32 %v988, %v1179
        %v1181 = vpop.f32.mrb[0].mxu0
        %1182 = vdwg.mxu0
        %v1183 = vmax.f32 %v1121, 0.0
        %v1184 = vmax.f32 %v1124, 0.0
        %v1185 = vmax.f32 %v1129, 0.0
        %v1186 = vmax.f32 %v1132, 0.0
        %v1187 = vmax.f32 %v1137, 0.0
        %v1188 = vmax.f32 %v1140, 0.0
        %v1189 = vmax.f32 %v1145, 0.0
        %v1190 = vmax.f32 %v1148, 0.0
        %v1191 = vmax.f32 %v1153, 0.0
        %v1192 = vmax.f32 %v1156, 0.0
        %v1193 = vmax.f32 %v1161, 0.0
        %v1194 = vmax.f32 %v1164, 0.0
        %v1195 = vmax.f32 %v1169, 0.0
        %v1196 = vmax.f32 %v1172, 0.0
        %v1197 = vmax.f32 %v1177, 0.0
        %v1198 = vmax.f32 %v1180, 0.0
        %p1199 = scmp.gt.s32.totalorder %s27, 0
        %s1200 = scalar_select %p1199, 0.5, 0.0
        %v1201 = vld [vmem:[#allocation3] sm:$0xff]
        %v1202 = vld [vmem:[#allocation3 + $0x8] sm:$0xff]
        %v1203 = vld [vmem:[#allocation3 + $0x10] sm:$0xff]
        %v1204 = vld [vmem:[#allocation3 + $0x18] sm:$0xff]
        %v1205 = vld [vmem:[#allocation3 + $0x20] sm:$0xff]
        %v1206 = vld [vmem:[#allocation3 + $0x28] sm:$0xff]
        %v1207 = vld [vmem:[#allocation3 + $0x30] sm:$0xff]
        %v1208 = vld [vmem:[#allocation3 + $0x38] sm:$0xff]
        %v1209 = vld [vmem:[#allocation3 + $0x40] sm:$0xff]
        %v1210 = vld [vmem:[#allocation3 + $0x48] sm:$0xff]
        %v1211 = vld [vmem:[#allocation3 + $0x50] sm:$0xff]
        %v1212 = vld [vmem:[#allocation3 + $0x58] sm:$0xff]
        %v1213 = vld [vmem:[#allocation3 + $0x60] sm:$0xff]
        %v1214 = vld [vmem:[#allocation3 + $0x68] sm:$0xff]
        %v1215 = vld [vmem:[#allocation3 + $0x70] sm:$0xff]
        %v1216 = vld [vmem:[#allocation3 + $0x78] sm:$0xff]
        %v1217 = vadd.f32 %v1183, %v1201
        %v1218 = vadd.f32 %v1184, %v1202
        %v1219 = vadd.f32 %v1185, %v1203
        %v1220 = vadd.f32 %v1186, %v1204
        %v1221 = vadd.f32 %v1187, %v1205
        %v1222 = vadd.f32 %v1188, %v1206
        %v1223 = vadd.f32 %v1189, %v1207
        %v1224 = vadd.f32 %v1190, %v1208
        %v1225 = vadd.f32 %v1191, %v1209
        %v1226 = vadd.f32 %v1192, %v1210
        %v1227 = vadd.f32 %v1193, %v1211
        %v1228 = vadd.f32 %v1194, %v1212
        %v1229 = vadd.f32 %v1195, %v1213
        %v1230 = vadd.f32 %v1196, %v1214
        %v1231 = vadd.f32 %v1197, %v1215
        %v1232 = vadd.f32 %v1198, %v1216
        %v1233 = vstv %s1200
        %v1234 = vmul.f32 %v1233, %v726
        %v1235 = vmul.f32 %v1233, %v727
        %v1236 = vmul.f32 %v1233, %v728
        %v1237 = vmul.f32 %v1233, %v729
        %v1238 = vmul.f32 %v1233, %v730
        %v1239 = vmul.f32 %v1233, %v731
        %v1240 = vmul.f32 %v1233, %v732
        %v1241 = vmul.f32 %v1233, %v733
        %v1242 = vmul.f32 %v1233, %v734
        %v1243 = vmul.f32 %v1233, %v735
        %v1244 = vmul.f32 %v1233, %v736
        %v1245 = vmul.f32 %v1233, %v737
        %v1246 = vmul.f32 %v1233, %v738
        %v1247 = vmul.f32 %v1233, %v739
        %v1248 = vmul.f32 %v1233, %v740
        %v1249 = vmul.f32 %v1233, %v741
        %v1250 = vadd.f32 %v1217, %v1234
        %v1251 = vadd.f32 %v1218, %v1235
        %v1252 = vadd.f32 %v1219, %v1236
        %v1253 = vadd.f32 %v1220, %v1237
        %v1254 = vadd.f32 %v1221, %v1238
        %v1255 = vadd.f32 %v1222, %v1239
        %v1256 = vadd.f32 %v1223, %v1240
        %v1257 = vadd.f32 %v1224, %v1241
        %v1258 = vadd.f32 %v1225, %v1242
        %v1259 = vadd.f32 %v1226, %v1243
        %v1260 = vadd.f32 %v1227, %v1244
        %v1261 = vadd.f32 %v1228, %v1245
        %v1262 = vadd.f32 %v1229, %v1246
        %v1263 = vadd.f32 %v1230, %v1247
        %v1264 = vadd.f32 %v1231, %v1248
        %v1265 = vadd.f32 %v1232, %v1249
        %1266 = vst [vmem:[#allocation2] sm:$0xff] %v1250
        %1267 = vst [vmem:[#allocation2 + $0x8] sm:$0xff] %v1251
        %1268 = vst [vmem:[#allocation2 + $0x10] sm:$0xff] %v1252
        %1269 = vst [vmem:[#allocation2 + $0x18] sm:$0xff] %v1253
        %1270 = vst [vmem:[#allocation2 + $0x20] sm:$0xff] %v1254
        %1271 = vst [vmem:[#allocation2 + $0x28] sm:$0xff] %v1255
        %1272 = vst [vmem:[#allocation2 + $0x30] sm:$0xff] %v1256
        %1273 = vst [vmem:[#allocation2 + $0x38] sm:$0xff] %v1257
        %1274 = vst [vmem:[#allocation2 + $0x40] sm:$0xff] %v1258
        %1275 = vst [vmem:[#allocation2 + $0x48] sm:$0xff] %v1259
        %1276 = vst [vmem:[#allocation2 + $0x50] sm:$0xff] %v1260
        %1277 = vst [vmem:[#allocation2 + $0x58] sm:$0xff] %v1261
        %1278 = vst [vmem:[#allocation2 + $0x60] sm:$0xff] %v1262
        %1279 = vst [vmem:[#allocation2 + $0x68] sm:$0xff] %v1263
        %1280 = vst [vmem:[#allocation2 + $0x70] sm:$0xff] %v1264
        %1281 = vst [vmem:[#allocation2 + $0x78] sm:$0xff] %v1265
        %v1282 = vld [vmem:[#allocation4] sm:$0xff]
        %v1283 = vld [vmem:[#allocation4 + $0x8] sm:$0xff]
        %v1284 = vld [vmem:[#allocation4 + $0x10] sm:$0xff]
        %v1285 = vld [vmem:[#allocation4 + $0x18] sm:$0xff]
        %v1286 = vld [vmem:[#allocation4 + $0x20] sm:$0xff]
        %v1287 = vld [vmem:[#allocation4 + $0x28] sm:$0xff]
        %v1288 = vld [vmem:[#allocation4 + $0x30] sm:$0xff]
        %v1289 = vld [vmem:[#allocation4 + $0x38] sm:$0xff]
        %v1290 = vld [vmem:[#allocation4 + $0x40] sm:$0xff]
        %v1291 = vld [vmem:[#allocation4 + $0x48] sm:$0xff]
        %v1292 = vld [vmem:[#allocation4 + $0x50] sm:$0xff]
        %v1293 = vld [vmem:[#allocation4 + $0x58] sm:$0xff]
        %v1294 = vld [vmem:[#allocation4 + $0x60] sm:$0xff]
        %v1295 = vld [vmem:[#allocation4 + $0x68] sm:$0xff]
        %v1296 = vld [vmem:[#allocation4 + $0x70] sm:$0xff]
        %v1297 = vld [vmem:[#allocation4 + $0x78] sm:$0xff]
        %s1298 = sld [smem:[#allocation16 + %s27]]
        %v1299 = vstv %s1298
        %v1300 = vmul.f32 %v1299, %v1250
        %v1301 = vmul.f32 %v1299, %v1251
        %v1302 = vmul.f32 %v1299, %v1252
        %v1303 = vmul.f32 %v1299, %v1253
        %v1304 = vmul.f32 %v1299, %v1254
        %v1305 = vmul.f32 %v1299, %v1255
        %v1306 = vmul.f32 %v1299, %v1256
        %v1307 = vmul.f32 %v1299, %v1257
        %v1308 = vmul.f32 %v1299, %v1258
        %v1309 = vmul.f32 %v1299, %v1259
        %v1310 = vmul.f32 %v1299, %v1260
        %v1311 = vmul.f32 %v1299, %v1261
        %v1312 = vmul.f32 %v1299, %v1262
        %v1313 = vmul.f32 %v1299, %v1263
        %v1314 = vmul.f32 %v1299, %v1264
        %v1315 = vmul.f32 %v1299, %v1265
        %v1316 = vadd.f32 %v1282, %v1300
        %v1317 = vadd.f32 %v1283, %v1301
        %v1318 = vadd.f32 %v1284, %v1302
        %v1319 = vadd.f32 %v1285, %v1303
        %v1320 = vadd.f32 %v1286, %v1304
        %v1321 = vadd.f32 %v1287, %v1305
        %v1322 = vadd.f32 %v1288, %v1306
        %v1323 = vadd.f32 %v1289, %v1307
        %v1324 = vadd.f32 %v1290, %v1308
        %v1325 = vadd.f32 %v1291, %v1309
        %v1326 = vadd.f32 %v1292, %v1310
        %v1327 = vadd.f32 %v1293, %v1311
        %v1328 = vadd.f32 %v1294, %v1312
        %v1329 = vadd.f32 %v1295, %v1313
        %v1330 = vadd.f32 %v1296, %v1314
        %v1331 = vadd.f32 %v1297, %v1315
        %1332 = vst [vmem:[#allocation4] sm:$0xff] %v1316
        %1333 = vst [vmem:[#allocation4 + $0x8] sm:$0xff] %v1317
        %1334 = vst [vmem:[#allocation4 + $0x10] sm:$0xff] %v1318
        %1335 = vst [vmem:[#allocation4 + $0x18] sm:$0xff] %v1319
        %1336 = vst [vmem:[#allocation4 + $0x20] sm:$0xff] %v1320
        %1337 = vst [vmem:[#allocation4 + $0x28] sm:$0xff] %v1321
        %1338 = vst [vmem:[#allocation4 + $0x30] sm:$0xff] %v1322
        %1339 = vst [vmem:[#allocation4 + $0x38] sm:$0xff] %v1323
        %1340 = vst [vmem:[#allocation4 + $0x40] sm:$0xff] %v1324
        %1341 = vst [vmem:[#allocation4 + $0x48] sm:$0xff] %v1325
        %1342 = vst [vmem:[#allocation4 + $0x50] sm:$0xff] %v1326
        %1343 = vst [vmem:[#allocation4 + $0x58] sm:$0xff] %v1327
        %1344 = vst [vmem:[#allocation4 + $0x60] sm:$0xff] %v1328
        %1345 = vst [vmem:[#allocation4 + $0x68] sm:$0xff] %v1329
        %1346 = vst [vmem:[#allocation4 + $0x70] sm:$0xff] %v1330
        %1347 = vst [vmem:[#allocation4 + $0x78] sm:$0xff] %v1331
        %p1348 = scmp.eq.s32.totalorder %s27, 5
        // Predicated region
        $region85: #{tpu_custom_call.1} parent=55 // pred_check
          %p1349 = pneg %p1348
        $region86: #{tpu_custom_call.1} parent=55 // pred_check_branch
          %1351 = sbr.rel (%p1349) target = $region88
        $region87: #{tpu_custom_call.1} parent=55 // pred_region
          %v1352 = vld [vmem:[#allocation4] sm:$0xff]
          %v1353 = vld [vmem:[#allocation4 + $0x8] sm:$0xff]
          %v1354 = vld [vmem:[#allocation4 + $0x10] sm:$0xff]
          %v1355 = vld [vmem:[#allocation4 + $0x18] sm:$0xff]
          %v1356 = vld [vmem:[#allocation4 + $0x20] sm:$0xff]
          %v1357 = vld [vmem:[#allocation4 + $0x28] sm:$0xff]
          %v1358 = vld [vmem:[#allocation4 + $0x30] sm:$0xff]
          %v1359 = vld [vmem:[#allocation4 + $0x38] sm:$0xff]
          %v1360 = vld [vmem:[#allocation4 + $0x40] sm:$0xff]
          %v1361 = vld [vmem:[#allocation4 + $0x48] sm:$0xff]
          %v1362 = vld [vmem:[#allocation4 + $0x50] sm:$0xff]
          %v1363 = vld [vmem:[#allocation4 + $0x58] sm:$0xff]
          %v1364 = vld [vmem:[#allocation4 + $0x60] sm:$0xff]
          %v1365 = vld [vmem:[#allocation4 + $0x68] sm:$0xff]
          %v1366 = vld [vmem:[#allocation4 + $0x70] sm:$0xff]
          %v1367 = vld [vmem:[#allocation4 + $0x78] sm:$0xff]
          %v1368 = vpack.c.bf16 %v1353, %v1352
          %v1369 = vpack.c.bf16 %v1355, %v1354
          %v1370 = vpack.c.bf16 %v1357, %v1356
          %v1371 = vpack.c.bf16 %v1359, %v1358
          %v1372 = vpack.c.bf16 %v1361, %v1360
          %v1373 = vpack.c.bf16 %v1363, %v1362
          %v1374 = vpack.c.bf16 %v1365, %v1364
          %v1375 = vpack.c.bf16 %v1367, %v1366
          %v1376 = vld [vmem:[#allocation15] sm:$0xf]
          %v1377 = vld [vmem:[#allocation15 + $0x4] sm:$0xf]
          %v1378 = vld [vmem:[#allocation15 + $0x8] sm:$0xf]
          %v1379 = vld [vmem:[#allocation15 + $0xc] sm:$0xf]
          %v1380 = vld [vmem:[#allocation15 + $0x10] sm:$0xf]
          %v1381 = vld [vmem:[#allocation15 + $0x14] sm:$0xf]
          %v1382 = vld [vmem:[#allocation15 + $0x18] sm:$0xf]
          %v1383 = vld [vmem:[#allocation15 + $0x1c] sm:$0xf]
          %v1384 = vld [vmem:[#allocation15 + $0x20] sm:$0xf]
          %v1385 = vld [vmem:[#allocation15 + $0x24] sm:$0xf]
          %v1386 = vld [vmem:[#allocation15 + $0x28] sm:$0xf]
          %v1387 = vld [vmem:[#allocation15 + $0x2c] sm:$0xf]
          %v1388 = vld [vmem:[#allocation15 + $0x30] sm:$0xf]
          %v1389 = vld [vmem:[#allocation15 + $0x34] sm:$0xf]
          %v1390 = vld [vmem:[#allocation15 + $0x38] sm:$0xf]
          %v1391 = vld [vmem:[#allocation15 + $0x3c] sm:$0xf]
          %v1392 = vld [vmem:[%s7] sm:$0x1]
          %v1394 = vlaneseq
          %v1395 = vshrl.u32 %v1394, 7
          %v1396 = vsub.s32 0, %v1395
          %v1397 = vrot.slane %v1392, %v1396
          %v1415 = vunpack.c.l.b16 %v1376
          %v1416 = vunpack.c.l.b16 %v1377
          %v1417 = vunpack.c.l.b16 %v1378
          %v1418 = vunpack.c.l.b16 %v1379
          %v1419 = vunpack.c.l.b16 %v1380
          %v1420 = vunpack.c.l.b16 %v1381
          %v1421 = vunpack.c.l.b16 %v1382
          %v1422 = vunpack.c.l.b16 %v1383
          %v1423 = vunpack.c.l.b16 %v1384
          %v1424 = vunpack.c.l.b16 %v1385
          %v1425 = vunpack.c.l.b16 %v1386
          %v1426 = vunpack.c.l.b16 %v1387
          %v1427 = vunpack.c.l.b16 %v1388
          %v1428 = vunpack.c.l.b16 %v1389
          %v1429 = vunpack.c.l.b16 %v1390
          %v1430 = vunpack.c.l.b16 %v1391
          %v1431 = vpack.c.b16 %v1416, %v1415
          %v1432 = vpack.c.b16 %v1418, %v1417
          %v1433 = vpack.c.b16 %v1420, %v1419
          %v1434 = vpack.c.b16 %v1422, %v1421
          %v1435 = vpack.c.b16 %v1424, %v1423
          %v1436 = vpack.c.b16 %v1426, %v1425
          %v1437 = vpack.c.b16 %v1428, %v1427
          %v1438 = vpack.c.b16 %v1430, %v1429
          %1447 = vmatprep.subr.bf16.mxu0 0
          %1448 = vmatpush1.bf16.msra.mxu0 %v1431
          %1449 = vmatprep.subr.bf16.mxu0 0
          %1450 = vmatpush1.bf16.msra.mxu0 %v1432
          %1451 = vmatprep.subr.bf16.mxu0 0
          %1452 = vmatpush1.bf16.msra.mxu0 %v1433
          %1453 = vmatprep.subr.bf16.mxu0 0
          %1454 = vmatpush1.bf16.msra.mxu0 %v1434
          %1455 = vmatprep.subr.bf16.mxu0 0
          %1456 = vmatpush1.bf16.msra.mxu0 %v1435
          %1457 = vmatprep.subr.bf16.mxu0 0
          %1458 = vmatpush1.bf16.msra.mxu0 %v1436
          %1459 = vmatprep.subr.bf16.mxu0 0
          %1460 = vmatpush1.bf16.msra.mxu0 %v1437
          %1461 = vmatprep.subr.bf16.mxu0 0
          %1462 = vmatpush1.bf16.msra.mxu0 %v1438
          %1463 = vmatprep.subr.bf16.mxu0 0
          %1464 = vmatpush1.bf16.msra.mxu0 0
          %1465 = vmatprep.subr.bf16.mxu0 0
          %1466 = vmatpush1.bf16.msra.mxu0 0
          %1467 = vmatprep.subr.bf16.mxu0 0
          %1468 = vmatpush1.bf16.msra.mxu0 0
          %1469 = vmatprep.subr.bf16.mxu0 0
          %1470 = vmatpush1.bf16.msra.mxu0 0
          %1471 = vmatprep.subr.bf16.mxu0 0
          %1472 = vmatpush1.bf16.msra.mxu0 0
          %1473 = vmatprep.subr.bf16.mxu0 0
          %1474 = vmatpush1.bf16.msra.mxu0 0
          %1475 = vmatprep.subr.bf16.mxu0 0
          %1476 = vmatpush1.bf16.msra.mxu0 0
          %1477 = vmatprep.subr.bf16.mxu0 0
          %1478 = vmatpush1.bf16.msra.mxu0 0
          %1479 = vmatprep.mubr.bf16.mxu0 0
          %1480 = vmatmul.mubr.bf16.gmra.mrb[0].mxu0 %v1368
          %v1481 = vpop.f32.mrb[0].mxu0
          %v1482 = vadd.f32 %v1397, %v1481
          %v1483 = vpop.f32.mrb[0].mxu0
          %v1484 = vpop.f32.mrb[0].mxu0
          %v1485 = vadd.f32 %v1397, %v1484
          %v1486 = vpop.f32.mrb[0].mxu0
          %1487 = vmatprep.mubr.bf16.mxu0 0
          %1488 = vmatmul.mubr.bf16.gmra.mrb[0].mxu0 %v1369
          %v1489 = vpop.f32.mrb[0].mxu0
          %v1490 = vadd.f32 %v1397, %v1489
          %v1491 = vpop.f32.mrb[0].mxu0
          %v1492 = vpop.f32.mrb[0].mxu0
          %v1493 = vadd.f32 %v1397, %v1492
          %v1494 = vpop.f32.mrb[0].mxu0
          %1495 = vmatprep.mubr.bf16.mxu0 0
          %1496 = vmatmul.mubr.bf16.gmra.mrb[0].mxu0 %v1370
          %v1497 = vpop.f32.mrb[0].mxu0
          %v1498 = vadd.f32 %v1397, %v1497
          %v1499 = vpop.f32.mrb[0].mxu0
          %v1500 = vpop.f32.mrb[0].mxu0
          %v1501 = vadd.f32 %v1397, %v1500
          %v1502 = vpop.f32.mrb[0].mxu0
          %1503 = vmatprep.mubr.bf16.mxu0 0
          %1504 = vmatmul.mubr.bf16.gmra.mrb[0].mxu0 %v1371
          %v1505 = vpop.f32.mrb[0].mxu0
          %v1506 = vadd.f32 %v1397, %v1505
          %v1507 = vpop.f32.mrb[0].mxu0
          %v1508 = vpop.f32.mrb[0].mxu0
          %v1509 = vadd.f32 %v1397, %v1508
          %v1510 = vpop.f32.mrb[0].mxu0
          %1511 = vmatprep.mubr.bf16.mxu0 0
          %1512 = vmatmul.mubr.bf16.gmra.mrb[0].mxu0 %v1372
          %v1513 = vpop.f32.mrb[0].mxu0
          %v1514 = vadd.f32 %v1397, %v1513
          %v1515 = vpop.f32.mrb[0].mxu0
          %v1516 = vpop.f32.mrb[0].mxu0
          %v1517 = vadd.f32 %v1397, %v1516
          %v1518 = vpop.f32.mrb[0].mxu0
          %1519 = vmatprep.mubr.bf16.mxu0 0
          %1520 = vmatmul.mubr.bf16.gmra.mrb[0].mxu0 %v1373
          %v1521 = vpop.f32.mrb[0].mxu0
          %v1522 = vadd.f32 %v1397, %v1521
          %v1523 = vpop.f32.mrb[0].mxu0
          %v1524 = vpop.f32.mrb[0].mxu0
          %v1525 = vadd.f32 %v1397, %v1524
          %v1526 = vpop.f32.mrb[0].mxu0
          %1527 = vmatprep.mubr.bf16.mxu0 0
          %1528 = vmatmul.mubr.bf16.gmra.mrb[0].mxu0 %v1374
          %v1529 = vpop.f32.mrb[0].mxu0
          %v1530 = vadd.f32 %v1397, %v1529
          %v1531 = vpop.f32.mrb[0].mxu0
          %v1532 = vpop.f32.mrb[0].mxu0
          %v1533 = vadd.f32 %v1397, %v1532
          %v1534 = vpop.f32.mrb[0].mxu0
          %1535 = vmatprep.mubr.bf16.mxu0 0
          %1536 = vmatmul.mubr.bf16.gmra.mrb[0].mxu0 %v1375
          %v1537 = vpop.f32.mrb[0].mxu0
          %v1538 = vadd.f32 %v1397, %v1537
          %v1539 = vpop.f32.mrb[0].mxu0
          %v1540 = vpop.f32.mrb[0].mxu0
          %v1541 = vadd.f32 %v1397, %v1540
          %v1542 = vpop.f32.mrb[0].mxu0
          %1543 = vdwg.mxu0
          %1544 = vmax.xlane.f32.xlu0 %v1482
          %v1545 = vpop.xlane.xlu0 %1544
          %1546 = vmax.xlane.f32.xlu0 %v1485
          %v1547 = vpop.xlane.xlu0 %1546
          %1548 = vmax.xlane.f32.xlu0 %v1490
          %v1549 = vpop.xlane.xlu0 %1548
          %1550 = vmax.xlane.f32.xlu0 %v1493
          %v1551 = vpop.xlane.xlu0 %1550
          %1552 = vmax.xlane.f32.xlu0 %v1498
          %v1553 = vpop.xlane.xlu0 %1552
          %1554 = vmax.xlane.f32.xlu0 %v1501
          %v1555 = vpop.xlane.xlu0 %1554
          %1556 = vmax.xlane.f32.xlu0 %v1506
          %v1557 = vpop.xlane.xlu0 %1556
          %1558 = vmax.xlane.f32.xlu0 %v1509
          %v1559 = vpop.xlane.xlu0 %1558
          %1560 = vmax.xlane.f32.xlu0 %v1514
          %v1561 = vpop.xlane.xlu0 %1560
          %1562 = vmax.xlane.f32.xlu0 %v1517
          %v1563 = vpop.xlane.xlu0 %1562
          %1564 = vmax.xlane.f32.xlu0 %v1522
          %v1565 = vpop.xlane.xlu0 %1564
          %1566 = vmax.xlane.f32.xlu0 %v1525
          %v1567 = vpop.xlane.xlu0 %1566
          %1568 = vmax.xlane.f32.xlu0 %v1530
          %v1569 = vpop.xlane.xlu0 %1568
          %1570 = vmax.xlane.f32.xlu0 %v1533
          %v1571 = vpop.xlane.xlu0 %1570
          %1572 = vmax.xlane.f32.xlu0 %v1538
          %v1573 = vpop.xlane.xlu0 %1572
          %1574 = vmax.xlane.f32.xlu0 %v1541
          %v1575 = vpop.xlane.xlu0 %1574
          %v1576 = vsub.f32 %v1482, %v1545
          %v1577 = vsub.f32 %v1485, %v1547
          %v1578 = vsub.f32 %v1490, %v1549
          %v1579 = vsub.f32 %v1493, %v1551
          %v1580 = vsub.f32 %v1498, %v1553
          %v1581 = vsub.f32 %v1501, %v1555
          %v1582 = vsub.f32 %v1506, %v1557
          %v1583 = vsub.f32 %v1509, %v1559
          %v1584 = vsub.f32 %v1514, %v1561
          %v1585 = vsub.f32 %v1517, %v1563
          %v1586 = vsub.f32 %v1522, %v1565
          %v1587 = vsub.f32 %v1525, %v1567
          %v1588 = vsub.f32 %v1530, %v1569
          %v1589 = vsub.f32 %v1533, %v1571
          %v1590 = vsub.f32 %v1538, %v1573
          %v1591 = vsub.f32 %v1541, %v1575
          %v1592 = vmul.f32 %v1576, 1.442695
          %v1593 = vpow.pop %v1592
          %v1594 = vmul.f32 %v1577, 1.442695
          %v1595 = vpow.pop %v1594
          %v1596 = vmul.f32 %v1578, 1.442695
          %v1597 = vpow.pop %v1596
          %v1598 = vmul.f32 %v1579, 1.442695
          %v1599 = vpow.pop %v1598
          %v1600 = vmul.f32 %v1580, 1.442695
          %v1601 = vpow.pop %v1600
          %v1602 = vmul.f32 %v1581, 1.442695
          %v1603 = vpow.pop %v1602
          %v1604 = vmul.f32 %v1582, 1.442695
          %v1605 = vpow.pop %v1604
          %v1606 = vmul.f32 %v1583, 1.442695
          %v1607 = vpow.pop %v1606
          %v1608 = vmul.f32 %v1584, 1.442695
          %v1609 = vpow.pop %v1608
          %v1610 = vmul.f32 %v1585, 1.442695
          %v1611 = vpow.pop %v1610
          %v1612 = vmul.f32 %v1586, 1.442695
          %v1613 = vpow.pop %v1612
          %v1614 = vmul.f32 %v1587, 1.442695
          %v1615 = vpow.pop %v1614
          %v1616 = vmul.f32 %v1588, 1.442695
          %v1617 = vpow.pop %v1616
          %v1618 = vmul.f32 %v1589, 1.442695
          %v1619 = vpow.pop %v1618
          %v1620 = vmul.f32 %v1590, 1.442695
          %v1621 = vpow.pop %v1620
          %v1622 = vmul.f32 %v1591, 1.442695
          %v1623 = vpow.pop %v1622
          %1624 = vadd.xlane.f32.xlu0 %v1593
          %v1625 = vpop.xlane.xlu0 %1624
          %1626 = vadd.xlane.f32.xlu0 %v1595
          %v1627 = vpop.xlane.xlu0 %1626
          %1628 = vadd.xlane.f32.xlu0 %v1597
          %v1629 = vpop.xlane.xlu0 %1628
          %1630 = vadd.xlane.f32.xlu0 %v1599
          %v1631 = vpop.xlane.xlu0 %1630
          %1632 = vadd.xlane.f32.xlu0 %v1601
          %v1633 = vpop.xlane.xlu0 %1632
          %1634 = vadd.xlane.f32.xlu0 %v1603
          %v1635 = vpop.xlane.xlu0 %1634
          %1636 = vadd.xlane.f32.xlu0 %v1605
          %v1637 = vpop.xlane.xlu0 %1636
          %1638 = vadd.xlane.f32.xlu0 %v1607
          %v1639 = vpop.xlane.xlu0 %1638
          %1640 = vadd.xlane.f32.xlu0 %v1609
          %v1641 = vpop.xlane.xlu0 %1640
          %1642 = vadd.xlane.f32.xlu0 %v1611
          %v1643 = vpop.xlane.xlu0 %1642
          %1644 = vadd.xlane.f32.xlu0 %v1613
          %v1645 = vpop.xlane.xlu0 %1644
          %1646 = vadd.xlane.f32.xlu0 %v1615
          %v1647 = vpop.xlane.xlu0 %1646
          %1648 = vadd.xlane.f32.xlu0 %v1617
          %v1649 = vpop.xlane.xlu0 %1648
          %1650 = vadd.xlane.f32.xlu0 %v1619
          %v1651 = vpop.xlane.xlu0 %1650
          %1652 = vadd.xlane.f32.xlu0 %v1621
          %v1653 = vpop.xlane.xlu0 %1652
          %1654 = vadd.xlane.f32.xlu0 %v1623
          %v1655 = vpop.xlane.xlu0 %1654
          %v1656 = vlog2.pop %v1625
          %v1657 = vmul.f32 %v1656, 0.6931472
          %v1658 = vlog2.pop %v1627
          %v1659 = vmul.f32 %v1658, 0.6931472
          %v1660 = vlog2.pop %v1629
          %v1661 = vmul.f32 %v1660, 0.6931472
          %v1662 = vlog2.pop %v1631
          %v1663 = vmul.f32 %v1662, 0.6931472
          %v1664 = vlog2.pop %v1633
          %v1665 = vmul.f32 %v1664, 0.6931472
          %v1666 = vlog2.pop %v1635
          %v1667 = vmul.f32 %v1666, 0.6931472
          %v1668 = vlog2.pop %v1637
          %v1669 = vmul.f32 %v1668, 0.6931472
          %v1670 = vlog2.pop %v1639
          %v1671 = vmul.f32 %v1670, 0.6931472
          %v1672 = vlog2.pop %v1641
          %v1673 = vmul.f32 %v1672, 0.6931472
          %v1674 = vlog2.pop %v1643
          %v1675 = vmul.f32 %v1674, 0.6931472
          %v1676 = vlog2.pop %v1645
          %v1677 = vmul.f32 %v1676, 0.6931472
          %v1678 = vlog2.pop %v1647
          %v1679 = vmul.f32 %v1678, 0.6931472
          %v1680 = vlog2.pop %v1649
          %v1681 = vmul.f32 %v1680, 0.6931472
          %v1682 = vlog2.pop %v1651
          %v1683 = vmul.f32 %v1682, 0.6931472
          %v1684 = vlog2.pop %v1653
          %v1685 = vmul.f32 %v1684, 0.6931472
          %v1686 = vlog2.pop %v1655
          %v1687 = vmul.f32 %v1686, 0.6931472
          %v1688 = vsub.f32 %v1576, %v1657
          %v1689 = vsub.f32 %v1577, %v1659
          %v1690 = vsub.f32 %v1578, %v1661
          %v1691 = vsub.f32 %v1579, %v1663
          %v1692 = vsub.f32 %v1580, %v1665
          %v1693 = vsub.f32 %v1581, %v1667
          %v1694 = vsub.f32 %v1582, %v1669
          %v1695 = vsub.f32 %v1583, %v1671
          %v1696 = vsub.f32 %v1584, %v1673
          %v1697 = vsub.f32 %v1585, %v1675
          %v1698 = vsub.f32 %v1586, %v1677
          %v1699 = vsub.f32 %v1587, %v1679
          %v1700 = vsub.f32 %v1588, %v1681
          %v1701 = vsub.f32 %v1589, %v1683
          %v1702 = vsub.f32 %v1590, %v1685
          %v1703 = vsub.f32 %v1591, %v1687
          %1704 = vst [vmem:[#allocation17] sm:$0xff] %v1688
          %1705 = vst [vmem:[#allocation17 + $0x8] sm:$0xff] %v1689
          %1706 = vst [vmem:[#allocation17 + $0x10] sm:$0xff] %v1690
          %1707 = vst [vmem:[#allocation17 + $0x18] sm:$0xff] %v1691
          %1708 = vst [vmem:[#allocation17 + $0x20] sm:$0xff] %v1692
          %1709 = vst [vmem:[#allocation17 + $0x28] sm:$0xff] %v1693
          %1710 = vst [vmem:[#allocation17 + $0x30] sm:$0xff] %v1694
          %1711 = vst [vmem:[#allocation17 + $0x38] sm:$0xff] %v1695
          %1712 = vst [vmem:[#allocation17 + $0x40] sm:$0xff] %v1696
          %1713 = vst [vmem:[#allocation17 + $0x48] sm:$0xff] %v1697
          %1714 = vst [vmem:[#allocation17 + $0x50] sm:$0xff] %v1698
          %1715 = vst [vmem:[#allocation17 + $0x58] sm:$0xff] %v1699
          %1716 = vst [vmem:[#allocation17 + $0x60] sm:$0xff] %v1700
          %1717 = vst [vmem:[#allocation17 + $0x68] sm:$0xff] %v1701
          %1718 = vst [vmem:[#allocation17 + $0x70] sm:$0xff] %v1702
          %1719 = vst [vmem:[#allocation17 + $0x78] sm:$0xff] %v1703
        $region88: #{tpu_custom_call.1} parent=55 // pred_fallthru
          _
        // Predicated region
        $region89: #{tpu_custom_call.1} parent=55 // pred_check
          %p1720 = pneg %p239
        $region90: #{tpu_custom_call.1} parent=55 // pred_check_branch
          %1722 = sbr.rel (%p1720) target = $region92
        $region91: #{tpu_custom_call.1} parent=55 // pred_region
          %s1724 = ssub.s32 2048, 2048
          %1725 = vsyncadd [#allocation8], %s1724
          %s1726 = sshll.u32 [#allocation17], 4
          %s1727 = int_to_ptr.vmem [resolvable:$true] %s1726
          %1732 = dma.vmem_to_hbm [thread:$0]  %s1727, 2048, %s9, [#allocation8], 128, 128, 8
        $region92: #{tpu_custom_call.1} parent=55 // pred_fallthru
          _
        // Predicated region
        $region93: #{tpu_custom_call.1} parent=55 // pred_check
          %p1733 = pneg %p239
        $region94: #{tpu_custom_call.1} parent=55 // pred_check_branch
          %1735 = sbr.rel (%p1733) target = $region96
        $region95: #{tpu_custom_call.1} parent=55 // pred_region
          %1736 = dma.done [#allocation8], 2048
        $region96: #{tpu_custom_call.1} parent=55 // pred_fallthru
          _
      $region56: #{tpu_custom_call.1} parent=5 // pred_fallthru
        _
      %p1737 = scmp.le.s32.totalorder 2, %s22
      // Predicated region
      $region97: #{tpu_custom_call.1} parent=5 // pred_check
        %p1738 = pneg %p1737
      $region98: #{tpu_custom_call.1} parent=5 // pred_check_branch
        %1740 = sbr.rel (%p1738) target = $region100
      $region99: #{tpu_custom_call.1} parent=5 // pred_region
        %s1741 = ssub.s32 %s22, 2
      $region100: #{tpu_custom_call.1} parent=5 // pred_fallthru
        _
    $region6: #{tpu_custom_call.1} parent=1 // loop_footer
      %s26 = sadd.s32 1, %s22
    $region7: #{tpu_custom_call.1} parent=1 // loop_footer_branch
      %21 = sbr.rel target = $region3
    $region8: #{tpu_custom_call.1} parent=1 // loop_exit
      _
    %1742 = vsyncpa [#allocation7], 1
    %s1743 = scalar_lea.sflag [#allocation7], 1
    %1744 = vsyncpa %s1743, 1
    %1745 = vsyncpa [#allocation11], 1
    %1746 = vsyncpa [#allocation14], 1
    %s1747 = scalar_lea.sflag [#allocation14], 1
    %1748 = vsyncpa %s1747, 1
    %1749 = vsyncpa [#allocation8], 1
    %s1750 = scalar_lea.sflag [#allocation8], 1
    %1751 = vsyncpa %s1750, 1
    %1752 = vsyncpa [#allocation9], 1
    %s1753 = scalar_lea.sflag [#allocation9], 1
    %1754 = vsyncpa %s1753, 1

</llo_original>
